<compile_context>
chip_gen: v7x
topology: tpu7x:2x2x1
jax: 0.10.0
libtpu: 0.0.40
codegen_flags: <defaults>
</compile_context>

<pallas_src>
import functools

import jax
import jax.numpy as jnp
from jax import lax
from jax.experimental import pallas as pl
from jax.experimental.pallas import tpu as pltpu


# ----------------------------------------------------------------------------
# Pallas kernels
# ----------------------------------------------------------------------------
def _conv_bias_stats_kernel(x_ref, w_ref, b_ref, y_ref, stats_ref, patch_ref,
                            *, kh, kw, pad):
    """conv3x3 ('same') + bias for one NHWC image, with fused BN partial stats.

    x_ref:     (1, H, W, Cin)      f32
    w_ref:     (kh*kw*Cin, Cout)   bf16   (HWIO flattened over (dy, dx, ci))
    b_ref:     (1, Cout)           f32
    y_ref:     (1, H, W, Cout)     f32    conv output (pre-BN)
    stats_ref: (1, 2, Cout)        f32    [sum, sum-of-squares] over this image
    patch_ref: (H, W, kh*kw*Cin)   f32    VMEM scratch: im2col with implicit 0-pad
    """
    _, h, w, cin = x_ref.shape

    # --- im2col with implicit zero padding (all offsets static; no XLA pad) ---
    # patch[y, x, (dy*kw + dx)*cin + ci] = x_padded[y + dy, x + dx, ci]
    patch_ref[...] = jnp.zeros_like(patch_ref)
    for dy in range(kh):
        oy0 = max(0, pad - dy)
        oy1 = min(h, h + pad - dy)
        iy0 = oy0 + dy - pad
        for dx in range(kw):
            ox0 = max(0, pad - dx)
            ox1 = min(w, w + pad - dx)
            ix0 = ox0 + dx - pad
            k = dy * kw + dx
            patch_ref[oy0:oy1, ox0:ox1, k * cin:(k + 1) * cin] = x_ref[
                0, iy0:iy0 + (oy1 - oy0), ix0:ix0 + (ox1 - ox0), :]

    # --- single MXU contraction: (H, W, kh*kw*Cin) x (kh*kw*Cin, Cout) ---
    acc = jnp.einsum(
        "hwk,kc->hwc",
        patch_ref[...].astype(jnp.bfloat16), w_ref[...],
        preferred_element_type=jnp.float32)
    acc = acc + b_ref[...]                                   # (1, Cout) broadcast
    y_ref[0] = acc.astype(y_ref.dtype)

    # --- fused BN statistics (per-image partials; reduced over N outside) ---
    col = jnp.sum(acc, axis=0)                               # (W, Cout)
    stats_ref[0, 0:1, :] = jnp.sum(col, axis=0, keepdims=True)
    col2 = jnp.sum(acc * acc, axis=0)                        # (W, Cout)
    stats_ref[0, 1:2, :] = jnp.sum(col2, axis=0, keepdims=True)


def _bn_relu_kernel(y_ref, scale_ref, shift_ref, o_ref):
    """Affine BatchNorm (precomputed scale/shift) + ReLU on a lane-dense view.

    y_ref:  (1, H, W*C) f32   scale_ref/shift_ref: (1, 1, W*C) f32
    """
    v = y_ref[...] * scale_ref[...] + shift_ref[...]
    o_ref[...] = jnp.maximum(v, 0.0).astype(o_ref.dtype)


# ----------------------------------------------------------------------------
# Forward wrapper (NCHW in / NCHW out, like the PyTorch module)
# ----------------------------------------------------------------------------
def conv_synbn_relu_forward(x_nchw, params, eps=1e-5):
    n, cin, h, w = x_nchw.shape
    cout, _, kh, kw = params["conv_w"].shape
    pad = (kh - 1) // 2                                      # conv3x3, padding=1

    x = jnp.transpose(x_nchw, (0, 2, 3, 1)).astype(jnp.float32)      # NCHW -> NHWC
    # OIHW -> HWIO -> (kh*kw*Cin, Cout); bf16 operands for the MXU.
    w_mat = jnp.transpose(params["conv_w"], (2, 3, 1, 0)).reshape(
        kh * kw * cin, cout).astype(jnp.bfloat16)
    b = params["conv_b"].reshape(1, cout).astype(jnp.float32)

    kern = functools.partial(_conv_bias_stats_kernel, kh=kh, kw=kw, pad=pad)
    y, stats = pl.pallas_call(
        kern,
        out_shape=(
            jax.ShapeDtypeStruct((n, h, w, cout), jnp.float32),
            jax.ShapeDtypeStruct((n, 2, cout), jnp.float32),
        ),
        grid=(n,),
        in_specs=[
            pl.BlockSpec((1, h, w, cin), lambda i: (i, 0, 0, 0)),
            pl.BlockSpec((kh * kw * cin, cout), lambda i: (0, 0)),
            pl.BlockSpec((1, cout), lambda i: (0, 0)),
        ],
        out_specs=(
            pl.BlockSpec((1, h, w, cout), lambda i: (i, 0, 0, 0)),
            pl.BlockSpec((1, 2, cout), lambda i: (i, 0, 0)),
        ),
        scratch_shapes=[pltpu.VMEM((h, w, kh * kw * cin), jnp.float32)],
        compiler_params=pltpu.CompilerParams(dimension_semantics=("parallel",)),
    )(x, w_mat, b)

    # Tiny O(Cout) work in XLA: reduce the fused partial stats, build scale/shift.
    count = n * h * w
    s = jnp.sum(stats, axis=0)                               # (2, Cout)
    mean = s[0] / count
    var = s[1] / count - mean * mean                         # biased var (training BN)
    var = jnp.maximum(var, 0.0)                              # guard fp cancellation
    scale = (params["bn_g"] * lax.rsqrt(var + eps)).astype(jnp.float32)
    shift = (params["bn_b"] - mean * scale).astype(jnp.float32)

    # Lane-dense elementwise pass: collapse (W, Cout) -> W*Cout on the 128-lane
    # axis (trailing-dim reshape is a free contiguous bitcast in XLA).
    wc = w * cout
    y_flat = y.reshape(n, h, wc)
    scale_t = jnp.tile(scale, w).reshape(1, 1, wc)           # value at x*Cout+c = scale[c]
    shift_t = jnp.tile(shift, w).reshape(1, 1, wc)
    out_flat = pl.pallas_call(
        _bn_relu_kernel,
        out_shape=jax.ShapeDtypeStruct((n, h, wc), jnp.float32),
        grid=(n,),
        in_specs=[
            pl.BlockSpec((1, h, wc), lambda i: (i, 0, 0)),
            pl.BlockSpec((1, 1, wc), lambda i: (0, 0, 0)),
            pl.BlockSpec((1, 1, wc), lambda i: (0, 0, 0)),
        ],
        out_specs=pl.BlockSpec((1, h, wc), lambda i: (i, 0, 0)),
        compiler_params=pltpu.CompilerParams(dimension_semantics=("parallel",)),
    )(y_flat, scale_t, shift_t)

    out = out_flat.reshape(n, h, w, cout)
    return jnp.transpose(out, (0, 3, 1, 2))                  # NHWC -> NCHW


# ----------------------------------------------------------------------------
# Pure-JAX reference (same bf16-operand / f32-accumulation conv recipe)
# ----------------------------------------------------------------------------
def reference_forward(x_nchw, params, eps=1e-5):
    x = jnp.transpose(x_nchw, (0, 2, 3, 1)).astype(jnp.float32)
    w_hwio = jnp.transpose(params["conv_w"], (2, 3, 1, 0))
    y = lax.conv_general_dilated(
        x.astype(jnp.bfloat16), w_hwio.astype(jnp.bfloat16),
        window_strides=(1, 1), padding=((1, 1), (1, 1)),
        dimension_numbers=("NHWC", "HWIO", "NHWC"),
        preferred_element_type=jnp.float32) + params["conv_b"]
    mean = jnp.mean(y, axis=(0, 1, 2))
    var = jnp.var(y, axis=(0, 1, 2))                         # biased, training-mode BN
    out = jnp.maximum((y - mean) / jnp.sqrt(var + eps) * params["bn_g"]
                      + params["bn_b"], 0.0)
    return jnp.transpose(out, (0, 3, 1, 2))


# ----------------------------------------------------------------------------
if __name__ == "__main__":
    N, C_IN, C_OUT, H, W = 2, 4, 8, 16, 16                   # W * C_OUT = 128 lanes

    key = jax.random.PRNGKey(0)
    ks = jax.random.split(key, 5)
    params = {
        # Conv2d(in_, out, 3, padding=1): weight OIHW, bias (out,)
        "conv_w": 0.1 * jax.random.normal(ks[0], (C_OUT, C_IN, 3, 3), jnp.float32),
        "conv_b": 0.1 * jax.random.normal(ks[1], (C_OUT,), jnp.float32),
        "bn_g": 1.0 + 0.1 * jax.random.normal(ks[2], (C_OUT,), jnp.float32),
        "bn_b": 0.1 * jax.random.normal(ks[3], (C_OUT,), jnp.float32),
    }
    x = jax.random.normal(ks[4], (N, C_IN, H, W), jnp.float32)

    out = jax.block_until_ready(jax.jit(conv_synbn_relu_forward)(x, params))
    ref = jax.block_until_ready(reference_forward(x, params))

    assert out.shape == (N, C_OUT, H, W), out.shape
    max_err = float(jnp.max(jnp.abs(out - ref)))
    assert jnp.allclose(out, ref, atol=2e-3, rtol=2e-3), max_err

    print("KERNEL_OK")
</pallas_src>

<mosaic_0001>
module attributes {stable_mosaic.version = 11 : i64} {
  func.func @_conv_bias_stats_kernel(%arg0: i32, %arg1: memref<1x16x16x4xf32, #tpu.memory_space<vmem>>, %arg2: memref<36x8xbf16, #tpu.memory_space<vmem>>, %arg3: memref<1x8xf32, #tpu.memory_space<vmem>>, %arg4: memref<1x16x16x8xf32, #tpu.memory_space<vmem>>, %arg5: memref<1x2x8xf32, #tpu.memory_space<vmem>>, %arg6: memref<16x16x36xf32, #tpu.memory_space<vmem>>) attributes {dimension_semantics = [#tpu.dimension_semantics<parallel>], iteration_bounds = array<i64: 2>, scalar_prefetch = 0 : i64, scratch_operands = 1 : i64, tpu.core_type = #tpu.core_type<tc>, window_params = [{transform_indices = @transform_0, window_bounds = array<i64: 1, 16, 16, 4>}, {pipeline_mode = #tpu.pipeline_mode<synchronous>, transform_indices = @transform_1, window_bounds = array<i64: 36, 8>}, {pipeline_mode = #tpu.pipeline_mode<synchronous>, transform_indices = @transform_2, window_bounds = array<i64: 1, 8>}, {transform_indices = @transform_3, window_bounds = array<i64: 1, 16, 16, 8>}, {transform_indices = @transform_4, window_bounds = array<i64: 1, 2, 8>}]} {
    %cst = arith.constant 0.000000e+00 : f32
    %0 = vector.broadcast %cst : f32 to vector<16x16x36xf32>
    %c0 = arith.constant 0 : index
    %c0_0 = arith.constant 0 : index
    %c0_1 = arith.constant 0 : index
    %1 = vector.load %arg6[%c0, %c0_0, %c0_1] : memref<16x16x36xf32, #tpu.memory_space<vmem>>, vector<16x16x36xf32>
    tpu.vector_store %arg6[%c0, %c0_0, %c0_1], %0 {strides = array<i32>} : memref<16x16x36xf32, #tpu.memory_space<vmem>>, vector<16x16x36xf32>,
    %c0_2 = arith.constant 0 : index
    %c0_3 = arith.constant 0 : index
    %c0_4 = arith.constant 0 : index
    %c0_5 = arith.constant 0 : index
    %2 = vector.load %arg1[%c0_2, %c0_3, %c0_4, %c0_5] : memref<1x16x16x4xf32, #tpu.memory_space<vmem>>, vector<1x15x15x4xf32>
    %3 = vector.shape_cast %2 : vector<1x15x15x4xf32> to vector<15x15x4xf32>
    %c1 = arith.constant 1 : index
    %c1_6 = arith.constant 1 : index
    %c0_7 = arith.constant 0 : index
    %4 = vector.load %arg6[%c1, %c1_6, %c0_7] : memref<16x16x36xf32, #tpu.memory_space<vmem>>, vector<15x15x4xf32>
    tpu.vector_store %arg6[%c1, %c1_6, %c0_7], %3 {strides = array<i32>} : memref<16x16x36xf32, #tpu.memory_space<vmem>>, vector<15x15x4xf32>,
    %c0_8 = arith.constant 0 : index
    %c0_9 = arith.constant 0 : index
    %c0_10 = arith.constant 0 : index
    %c0_11 = arith.constant 0 : index
    %5 = vector.load %arg1[%c0_8, %c0_9, %c0_10, %c0_11] : memref<1x16x16x4xf32, #tpu.memory_space<vmem>>, vector<1x15x16x4xf32>
    %6 = vector.shape_cast %5 : vector<1x15x16x4xf32> to vector<15x16x4xf32>
    %c1_12 = arith.constant 1 : index
    %c0_13 = arith.constant 0 : index
    %c4 = arith.constant 4 : index
    %7 = vector.load %arg6[%c1_12, %c0_13, %c4] : memref<16x16x36xf32, #tpu.memory_space<vmem>>, vector<15x16x4xf32>
    tpu.vector_store %arg6[%c1_12, %c0_13, %c4], %6 {strides = array<i32>} : memref<16x16x36xf32, #tpu.memory_space<vmem>>, vector<15x16x4xf32>,
    %c0_14 = arith.constant 0 : index
    %c0_15 = arith.constant 0 : index
    %c1_16 = arith.constant 1 : index
    %c0_17 = arith.constant 0 : index
    %8 = vector.load %arg1[%c0_14, %c0_15, %c1_16, %c0_17] : memref<1x16x16x4xf32, #tpu.memory_space<vmem>>, vector<1x15x15x4xf32>
    %9 = vector.shape_cast %8 : vector<1x15x15x4xf32> to vector<15x15x4xf32>
    %c1_18 = arith.constant 1 : index
    %c0_19 = arith.constant 0 : index
    %c8 = arith.constant 8 : index
    %10 = vector.load %arg6[%c1_18, %c0_19, %c8] : memref<16x16x36xf32, #tpu.memory_space<vmem>>, vector<15x15x4xf32>
    tpu.vector_store %arg6[%c1_18, %c0_19, %c8], %9 {strides = array<i32>} : memref<16x16x36xf32, #tpu.memory_space<vmem>>, vector<15x15x4xf32>,
    %c0_20 = arith.constant 0 : index
    %c0_21 = arith.constant 0 : index
    %c0_22 = arith.constant 0 : index
    %c0_23 = arith.constant 0 : index
    %11 = vector.load %arg1[%c0_20, %c0_21, %c0_22, %c0_23] : memref<1x16x16x4xf32, #tpu.memory_space<vmem>>, vector<1x16x15x4xf32>
    %12 = vector.shape_cast %11 : vector<1x16x15x4xf32> to vector<16x15x4xf32>
    %c0_24 = arith.constant 0 : index
    %c1_25 = arith.constant 1 : index
    %c12 = arith.constant 12 : index
    %13 = vector.load %arg6[%c0_24, %c1_25, %c12] : memref<16x16x36xf32, #tpu.memory_space<vmem>>, vector<16x15x4xf32>
    tpu.vector_store %arg6[%c0_24, %c1_25, %c12], %12 {strides = array<i32>} : memref<16x16x36xf32, #tpu.memory_space<vmem>>, vector<16x15x4xf32>,
    %c0_26 = arith.constant 0 : index
    %c0_27 = arith.constant 0 : index
    %c0_28 = arith.constant 0 : index
    %c0_29 = arith.constant 0 : index
    %14 = vector.load %arg1[%c0_26, %c0_27, %c0_28, %c0_29] : memref<1x16x16x4xf32, #tpu.memory_space<vmem>>, vector<1x16x16x4xf32>
    %15 = vector.shape_cast %14 : vector<1x16x16x4xf32> to vector<16x16x4xf32>
    %c0_30 = arith.constant 0 : index
    %c0_31 = arith.constant 0 : index
    %c16 = arith.constant 16 : index
    %16 = vector.load %arg6[%c0_30, %c0_31, %c16] : memref<16x16x36xf32, #tpu.memory_space<vmem>>, vector<16x16x4xf32>
    tpu.vector_store %arg6[%c0_30, %c0_31, %c16], %15 {strides = array<i32>} : memref<16x16x36xf32, #tpu.memory_space<vmem>>, vector<16x16x4xf32>,
    %c0_32 = arith.constant 0 : index
    %c0_33 = arith.constant 0 : index
    %c1_34 = arith.constant 1 : index
    %c0_35 = arith.constant 0 : index
    %17 = vector.load %arg1[%c0_32, %c0_33, %c1_34, %c0_35] : memref<1x16x16x4xf32, #tpu.memory_space<vmem>>, vector<1x16x15x4xf32>
    %18 = vector.shape_cast %17 : vector<1x16x15x4xf32> to vector<16x15x4xf32>
    %c0_36 = arith.constant 0 : index
    %c0_37 = arith.constant 0 : index
    %c20 = arith.constant 20 : index
    %19 = vector.load %arg6[%c0_36, %c0_37, %c20] : memref<16x16x36xf32, #tpu.memory_space<vmem>>, vector<16x15x4xf32>
    tpu.vector_store %arg6[%c0_36, %c0_37, %c20], %18 {strides = array<i32>} : memref<16x16x36xf32, #tpu.memory_space<vmem>>, vector<16x15x4xf32>,
    %c0_38 = arith.constant 0 : index
    %c1_39 = arith.constant 1 : index
    %c0_40 = arith.constant 0 : index
    %c0_41 = arith.constant 0 : index
    %20 = vector.load %arg1[%c0_38, %c1_39, %c0_40, %c0_41] : memref<1x16x16x4xf32, #tpu.memory_space<vmem>>, vector<1x15x15x4xf32>
    %21 = vector.shape_cast %20 : vector<1x15x15x4xf32> to vector<15x15x4xf32>
    %c0_42 = arith.constant 0 : index
    %c1_43 = arith.constant 1 : index
    %c24 = arith.constant 24 : index
    %22 = vector.load %arg6[%c0_42, %c1_43, %c24] : memref<16x16x36xf32, #tpu.memory_space<vmem>>, vector<15x15x4xf32>
    tpu.vector_store %arg6[%c0_42, %c1_43, %c24], %21 {strides = array<i32>} : memref<16x16x36xf32, #tpu.memory_space<vmem>>, vector<15x15x4xf32>,
    %c0_44 = arith.constant 0 : index
    %c1_45 = arith.constant 1 : index
    %c0_46 = arith.constant 0 : index
    %c0_47 = arith.constant 0 : index
    %23 = vector.load %arg1[%c0_44, %c1_45, %c0_46, %c0_47] : memref<1x16x16x4xf32, #tpu.memory_space<vmem>>, vector<1x15x16x4xf32>
    %24 = vector.shape_cast %23 : vector<1x15x16x4xf32> to vector<15x16x4xf32>
    %c0_48 = arith.constant 0 : index
    %c0_49 = arith.constant 0 : index
    %c28 = arith.constant 28 : index
    %25 = vector.load %arg6[%c0_48, %c0_49, %c28] : memref<16x16x36xf32, #tpu.memory_space<vmem>>, vector<15x16x4xf32>
    tpu.vector_store %arg6[%c0_48, %c0_49, %c28], %24 {strides = array<i32>} : memref<16x16x36xf32, #tpu.memory_space<vmem>>, vector<15x16x4xf32>,
    %c0_50 = arith.constant 0 : index
    %c1_51 = arith.constant 1 : index
    %c1_52 = arith.constant 1 : index
    %c0_53 = arith.constant 0 : index
    %26 = vector.load %arg1[%c0_50, %c1_51, %c1_52, %c0_53] : memref<1x16x16x4xf32, #tpu.memory_space<vmem>>, vector<1x15x15x4xf32>
    %27 = vector.shape_cast %26 : vector<1x15x15x4xf32> to vector<15x15x4xf32>
    %c0_54 = arith.constant 0 : index
    %c0_55 = arith.constant 0 : index
    %c32 = arith.constant 32 : index
    %28 = vector.load %arg6[%c0_54, %c0_55, %c32] : memref<16x16x36xf32, #tpu.memory_space<vmem>>, vector<15x15x4xf32>
    tpu.vector_store %arg6[%c0_54, %c0_55, %c32], %27 {strides = array<i32>} : memref<16x16x36xf32, #tpu.memory_space<vmem>>, vector<15x15x4xf32>,
    %c0_56 = arith.constant 0 : index
    %c0_57 = arith.constant 0 : index
    %c0_58 = arith.constant 0 : index
    %29 = vector.load %arg6[%c0_56, %c0_57, %c0_58] : memref<16x16x36xf32, #tpu.memory_space<vmem>>, vector<16x16x36xf32>
    %30 = arith.truncf %29 : vector<16x16x36xf32> to vector<16x16x36xbf16>
    %c0_59 = arith.constant 0 : index
    %c0_60 = arith.constant 0 : index
    %31 = vector.load %arg2[%c0_59, %c0_60] : memref<36x8xbf16, #tpu.memory_space<vmem>>, vector<36x8xbf16>
    "tpu.trace_start"() <{level = 10 : i32, message = "hwk,kc->hwc"}> : () -> ()
    %cst_61 = arith.constant dense<0.000000e+00> : vector<16x16x8xf32>
    %32 = tpu.matmul %30, %31, %cst_61 {dimension_numbers = #tpu.dot_dimension_numbers<[2], [0], [0, 1], [1], [0, 0, 0, 1, 1, 1], [], []>} : vector<16x16x36xbf16>, vector<36x8xbf16>, vector<16x16x8xf32> -> vector<16x16x8xf32>
    "tpu.trace_stop"() : () -> ()
    %c0_62 = arith.constant 0 : index
    %c0_63 = arith.constant 0 : index
    %33 = vector.load %arg3[%c0_62, %c0_63] : memref<1x8xf32, #tpu.memory_space<vmem>>, vector<1x8xf32>
    %34 = vector.shape_cast %33 : vector<1x8xf32> to vector<1x1x8xf32>
    %35 = vector.broadcast %34 : vector<1x1x8xf32> to vector<16x16x8xf32>
    %36 = arith.addf %32, %35 : vector<16x16x8xf32>
    %c0_64 = arith.constant 0 : index
    %c0_65 = arith.constant 0 : index
    %c0_66 = arith.constant 0 : index
    %c0_67 = arith.constant 0 : index
    %37 = vector.load %arg4[%c0_64, %c0_65, %c0_66, %c0_67] : memref<1x16x16x8xf32, #tpu.memory_space<vmem>>, vector<1x16x16x8xf32>
    %38 = vector.shape_cast %37 : vector<1x16x16x8xf32> to vector<16x16x8xf32>
    %39 = vector.shape_cast %36 : vector<16x16x8xf32> to vector<1x16x16x8xf32>
    tpu.vector_store %arg4[%c0_64, %c0_65, %c0_66, %c0_67], %39 {strides = array<i32>} : memref<1x16x16x8xf32, #tpu.memory_space<vmem>>, vector<1x16x16x8xf32>,
    %cst_68 = arith.constant dense<0.000000e+00> : vector<16x8xf32>
    %40 = vector.multi_reduction <add>, %36, %cst_68 [0] : vector<16x16x8xf32> to vector<16x8xf32>
    %cst_69 = arith.constant dense<0.000000e+00> : vector<8xf32>
    %41 = vector.multi_reduction <add>, %40, %cst_69 [0] : vector<16x8xf32> to vector<8xf32>
    %42 = vector.shape_cast %41 : vector<8xf32> to vector<1x8xf32>
    %c0_70 = arith.constant 0 : index
    %c0_71 = arith.constant 0 : index
    %c0_72 = arith.constant 0 : index
    %43 = vector.load %arg5[%c0_70, %c0_71, %c0_72] : memref<1x2x8xf32, #tpu.memory_space<vmem>>, vector<1x1x8xf32>
    %44 = vector.shape_cast %43 : vector<1x1x8xf32> to vector<1x8xf32>
    %45 = vector.shape_cast %42 : vector<1x8xf32> to vector<1x1x8xf32>
    tpu.vector_store %arg5[%c0_70, %c0_71, %c0_72], %45 {strides = array<i32>} : memref<1x2x8xf32, #tpu.memory_space<vmem>>, vector<1x1x8xf32>,
    %46 = arith.mulf %36, %36 : vector<16x16x8xf32>
    %cst_73 = arith.constant dense<0.000000e+00> : vector<16x8xf32>
    %47 = vector.multi_reduction <add>, %46, %cst_73 [0] : vector<16x16x8xf32> to vector<16x8xf32>
    %cst_74 = arith.constant dense<0.000000e+00> : vector<8xf32>
    %48 = vector.multi_reduction <add>, %47, %cst_74 [0] : vector<16x8xf32> to vector<8xf32>
    %49 = vector.shape_cast %48 : vector<8xf32> to vector<1x8xf32>
    %c0_75 = arith.constant 0 : index
    %c1_76 = arith.constant 1 : index
    %c0_77 = arith.constant 0 : index
    %50 = vector.load %arg5[%c0_75, %c1_76, %c0_77] : memref<1x2x8xf32, #tpu.memory_space<vmem>>, vector<1x1x8xf32>
    %51 = vector.shape_cast %50 : vector<1x1x8xf32> to vector<1x8xf32>
    %52 = vector.shape_cast %49 : vector<1x8xf32> to vector<1x1x8xf32>
    tpu.vector_store %arg5[%c0_75, %c1_76, %c0_77], %52 {strides = array<i32>} : memref<1x2x8xf32, #tpu.memory_space<vmem>>, vector<1x1x8xf32>,
    return
  }
  func.func @transform_0(%arg0: i32) -> (i32, i32, i32, i32) {
    %c0_i32 = arith.constant 0 : i32
    %c0_i32_0 = arith.constant 0 : i32
    %c0_i32_1 = arith.constant 0 : i32
    %c0_i32_2 = arith.constant 0 : i32
    return %arg0, %c0_i32, %c0_i32_0, %c0_i32_1 : i32, i32, i32, i32
  }
  func.func @transform_1(%arg0: i32) -> (i32, i32) {
    %c0_i32 = arith.constant 0 : i32
    %c0_i32_0 = arith.constant 0 : i32
    %c0_i32_1 = arith.constant 0 : i32
    return %c0_i32, %c0_i32_0 : i32, i32
  }
  func.func @transform_2(%arg0: i32) -> (i32, i32) {
    %c0_i32 = arith.constant 0 : i32
    %c0_i32_0 = arith.constant 0 : i32
    %c0_i32_1 = arith.constant 0 : i32
    return %c0_i32, %c0_i32_0 : i32, i32
  }
  func.func @transform_3(%arg0: i32) -> (i32, i32, i32, i32) {
    %c0_i32 = arith.constant 0 : i32
    %c0_i32_0 = arith.constant 0 : i32
    %c0_i32_1 = arith.constant 0 : i32
    %c0_i32_2 = arith.constant 0 : i32
    return %arg0, %c0_i32, %c0_i32_0, %c0_i32_1 : i32, i32, i32, i32
  }
  func.func @transform_4(%arg0: i32) -> (i32, i32, i32) {
    %c0_i32 = arith.constant 0 : i32
    %c0_i32_0 = arith.constant 0 : i32
    %c0_i32_1 = arith.constant 0 : i32
    return %arg0, %c0_i32, %c0_i32_0 : i32, i32, i32
  }
}

module attributes {stable_mosaic.version = 11 : i64} {
  func.func @_bn_relu_kernel(%arg0: i32, %arg1: memref<1x16x128xf32, #tpu.memory_space<vmem>>, %arg2: memref<1x1x128xf32, #tpu.memory_space<vmem>>, %arg3: memref<1x1x128xf32, #tpu.memory_space<vmem>>, %arg4: memref<1x16x128xf32, #tpu.memory_space<vmem>>) attributes {dimension_semantics = [#tpu.dimension_semantics<parallel>], iteration_bounds = array<i64: 2>, scalar_prefetch = 0 : i64, scratch_operands = 0 : i64, tpu.core_type = #tpu.core_type<tc>, window_params = [{transform_indices = @transform_0, window_bounds = array<i64: 1, 16, 128>}, {pipeline_mode = #tpu.pipeline_mode<synchronous>, transform_indices = @transform_1, window_bounds = array<i64: 1, 1, 128>}, {pipeline_mode = #tpu.pipeline_mode<synchronous>, transform_indices = @transform_2, window_bounds = array<i64: 1, 1, 128>}, {transform_indices = @transform_3, window_bounds = array<i64: 1, 16, 128>}]} {
    %c0 = arith.constant 0 : index
    %c0_0 = arith.constant 0 : index
    %c0_1 = arith.constant 0 : index
    %0 = vector.load %arg1[%c0, %c0_0, %c0_1] : memref<1x16x128xf32, #tpu.memory_space<vmem>>, vector<1x16x128xf32>
    %c0_2 = arith.constant 0 : index
    %c0_3 = arith.constant 0 : index
    %c0_4 = arith.constant 0 : index
    %1 = vector.load %arg2[%c0_2, %c0_3, %c0_4] : memref<1x1x128xf32, #tpu.memory_space<vmem>>, vector<1x1x128xf32>
    %2 = vector.broadcast %1 : vector<1x1x128xf32> to vector<1x16x128xf32>
    %3 = arith.mulf %0, %2 : vector<1x16x128xf32>
    %c0_5 = arith.constant 0 : index
    %c0_6 = arith.constant 0 : index
    %c0_7 = arith.constant 0 : index
    %4 = vector.load %arg3[%c0_5, %c0_6, %c0_7] : memref<1x1x128xf32, #tpu.memory_space<vmem>>, vector<1x1x128xf32>
    %5 = vector.broadcast %4 : vector<1x1x128xf32> to vector<1x16x128xf32>
    %6 = arith.addf %3, %5 : vector<1x16x128xf32>
    %cst = arith.constant 0.000000e+00 : f32
    %7 = vector.broadcast %cst : f32 to vector<1x16x128xf32>
    %8 = arith.maximumf %6, %7 : vector<1x16x128xf32>
    %c0_8 = arith.constant 0 : index
    %c0_9 = arith.constant 0 : index
    %c0_10 = arith.constant 0 : index
    %9 = vector.load %arg4[%c0_8, %c0_9, %c0_10] : memref<1x16x128xf32, #tpu.memory_space<vmem>>, vector<1x16x128xf32>
    tpu.vector_store %arg4[%c0_8, %c0_9, %c0_10], %8 {strides = array<i32>} : memref<1x16x128xf32, #tpu.memory_space<vmem>>, vector<1x16x128xf32>,
    return
  }
  func.func @transform_0(%arg0: i32) -> (i32, i32, i32) {
    %c0_i32 = arith.constant 0 : i32
    %c0_i32_0 = arith.constant 0 : i32
    %c0_i32_1 = arith.constant 0 : i32
    return %arg0, %c0_i32, %c0_i32_0 : i32, i32, i32
  }
  func.func @transform_1(%arg0: i32) -> (i32, i32, i32) {
    %c0_i32 = arith.constant 0 : i32
    %c0_i32_0 = arith.constant 0 : i32
    %c0_i32_1 = arith.constant 0 : i32
    %c0_i32_2 = arith.constant 0 : i32
    return %c0_i32, %c0_i32_0, %c0_i32_1 : i32, i32, i32
  }
  func.func @transform_2(%arg0: i32) -> (i32, i32, i32) {
    %c0_i32 = arith.constant 0 : i32
    %c0_i32_0 = arith.constant 0 : i32
    %c0_i32_1 = arith.constant 0 : i32
    %c0_i32_2 = arith.constant 0 : i32
    return %c0_i32, %c0_i32_0, %c0_i32_1 : i32, i32, i32
  }
  func.func @transform_3(%arg0: i32) -> (i32, i32, i32) {
    %c0_i32 = arith.constant 0 : i32
    %c0_i32_0 = arith.constant 0 : i32
    %c0_i32_1 = arith.constant 0 : i32
    return %arg0, %c0_i32, %c0_i32_0 : i32, i32, i32
  }
}

</mosaic_0001>

<llo_original>
// kernel: tile.18
$region0: #{tile.18}
  #allocation0 [shape = 's32[1]{0}', space=sflag, size = 0x4, scoped, tag = 'scoped memory for tile.18']
  %s0 = inlined_call_operand.vmem [shape: f32[8], index: 0, kind: input, shape index: {}]
  %s1 = inlined_call_operand.vmem [shape: f32[16,8], index: 1, kind: output, shape index: {}]
  // Predicated region
  $region2: #{tile.18} parent=0 // pred_check
    _
  $region3: #{tile.18} parent=0 // pred_check_branch
    %3 = sbr.rel (0) target = $region5
  $region4: #{tile.18} parent=0 // pred_region
    _
  $region5: #{tile.18} parent=0 // pred_fallthru
    _
  %v4 = vld [vmem:[%s0] ss:$0 sm:$0xff]
  %5 = vst [vmem:[%s1] sm:$0xff] %v4
  %s6 = scalar_lea.vmem %s1, 8
  %7 = vst [vmem:[%s6] sm:$0xff] %v4

// kernel: tile.19
$region0: #{tile.19}
  %s0 = inlined_call_operand.vmem [shape: f32[16,8], index: 0, kind: input, shape index: {}]
  %s1 = inlined_call_operand.vmem [shape: f32[1,1,128], index: 1, kind: output, shape index: {}]
  $region1: #{tile.19} parent=0
    #allocation0 [shape = 'u8[4096]{0}', space=vmem, size = 0x1000, scoped, tag = 'scoped mem for output reshape']
    %v2 = vld [vmem:[%s0] sm:$0x1]
    %vm3 = vcmask 64512
    %4 = vst.msk [vmem:[#allocation0] sm:$0x1] %vm3, %v2
    %s5 = scalar_lea.vmem %s0, 15
    %v6 = vld [vmem:[%s5] sm:$0x1]
    %7 = vrot.lane.b32.xlu0 %v6, 120
    %v8 = vpop.permute.xlu0 %7
    %vm9 = vcmask 1048512
    %10 = vst.msk [vmem:[#allocation0] sm:$0x1] %vm9, %v8
    %s11 = scalar_lea.vmem %s0, 14
    %v12 = vld [vmem:[%s11] sm:$0x1]
    %13 = vrot.lane.b32.xlu0 %v12, 112
    %v14 = vpop.permute.xlu0 %13
    %vm15 = vcmask 982912
    %16 = vst.msk [vmem:[#allocation0] sm:$0x1] %vm15, %v14
    %s17 = scalar_lea.vmem %s0, 13
    %v18 = vld [vmem:[%s17] sm:$0x1]
    %19 = vrot.lane.b32.xlu0 %v18, 104
    %v20 = vpop.permute.xlu0 %19
    %vm21 = vcmask 917312
    %22 = vst.msk [vmem:[#allocation0] sm:$0x1] %vm21, %v20
    %s23 = scalar_lea.vmem %s0, 12
    %v24 = vld [vmem:[%s23] sm:$0x1]
    %25 = vrot.lane.b32.xlu0 %v24, 96
    %v26 = vpop.permute.xlu0 %25
    %vm27 = vcmask 851712
    %28 = vst.msk [vmem:[#allocation0] sm:$0x1] %vm27, %v26
    %s29 = scalar_lea.vmem %s0, 11
    %v30 = vld [vmem:[%s29] sm:$0x1]
    %31 = vrot.lane.b32.xlu0 %v30, 88
    %v32 = vpop.permute.xlu0 %31
    %vm33 = vcmask 786112
    %34 = vst.msk [vmem:[#allocation0] sm:$0x1] %vm33, %v32
    %s35 = scalar_lea.vmem %s0, 10
    %v36 = vld [vmem:[%s35] sm:$0x1]
    %37 = vrot.lane.b32.xlu0 %v36, 80
    %v38 = vpop.permute.xlu0 %37
    %vm39 = vcmask 720512
    %40 = vst.msk [vmem:[#allocation0] sm:$0x1] %vm39, %v38
    %s41 = scalar_lea.vmem %s0, 9
    %v42 = vld [vmem:[%s41] sm:$0x1]
    %43 = vrot.lane.b32.xlu0 %v42, 72
    %v44 = vpop.permute.xlu0 %43
    %vm45 = vcmask 654912
    %46 = vst.msk [vmem:[#allocation0] sm:$0x1] %vm45, %v44
    %s47 = scalar_lea.vmem %s0, 8
    %v48 = vld [vmem:[%s47] sm:$0x1]
    %49 = vrot.lane.b32.xlu0 %v48, 64
    %v50 = vpop.permute.xlu0 %49
    %vm51 = vcmask 589312
    %52 = vst.msk [vmem:[#allocation0] sm:$0x1] %vm51, %v50
    %s53 = scalar_lea.vmem %s0, 7
    %v54 = vld [vmem:[%s53] sm:$0x1]
    %55 = vrot.lane.b32.xlu0 %v54, 56
    %v56 = vpop.permute.xlu0 %55
    %vm57 = vcmask 523712
    %58 = vst.msk [vmem:[#allocation0] sm:$0x1] %vm57, %v56
    %s59 = scalar_lea.vmem %s0, 6
    %v60 = vld [vmem:[%s59] sm:$0x1]
    %61 = vrot.lane.b32.xlu0 %v60, 48
    %v62 = vpop.permute.xlu0 %61
    %vm63 = vcmask 458112
    %64 = vst.msk [vmem:[#allocation0] sm:$0x1] %vm63, %v62
    %s65 = scalar_lea.vmem %s0, 5
    %v66 = vld [vmem:[%s65] sm:$0x1]
    %67 = vrot.lane.b32.xlu0 %v66, 40
    %v68 = vpop.permute.xlu0 %67
    %vm69 = vcmask 392512
    %70 = vst.msk [vmem:[#allocation0] sm:$0x1] %vm69, %v68
    %s71 = scalar_lea.vmem %s0, 4
    %v72 = vld [vmem:[%s71] sm:$0x1]
    %73 = vrot.lane.b32.xlu0 %v72, 32
    %v74 = vpop.permute.xlu0 %73
    %vm75 = vcmask 326912
    %76 = vst.msk [vmem:[#allocation0] sm:$0x1] %vm75, %v74
    %s77 = scalar_lea.vmem %s0, 3
    %v78 = vld [vmem:[%s77] sm:$0x1]
    %79 = vrot.lane.b32.xlu0 %v78, 24
    %v80 = vpop.permute.xlu0 %79
    %vm81 = vcmask 261312
    %82 = vst.msk [vmem:[#allocation0] sm:$0x1] %vm81, %v80
    %s83 = scalar_lea.vmem %s0, 2
    %v84 = vld [vmem:[%s83] sm:$0x1]
    %85 = vrot.lane.b32.xlu0 %v84, 16
    %v86 = vpop.permute.xlu0 %85
    %vm87 = vcmask 195712
    %88 = vst.msk [vmem:[#allocation0] sm:$0x1] %vm87, %v86
    %s89 = scalar_lea.vmem %s0, 1
    %v90 = vld [vmem:[%s89] sm:$0x1]
    %91 = vrot.lane.b32.xlu0 %v90, 8
    %v92 = vpop.permute.xlu0 %91
    %vm93 = vcmask 130112
    %94 = vst.msk [vmem:[#allocation0] sm:$0x1] %vm93, %v92
    %s96 = sshllo.u32 0, 1
    %v98 = vld [vmem:[#allocation0] sm:%s96]
    %s99 = sshllo.u32 0, 1
    %100 = vst [vmem:[%s1] sm:%s99] %v98

// kernel: conv_synbn_relu_forward.3
$region0: #{conv_synbn_relu_forward.3}
  #allocation0 [shape = 'u32[]', space=smem, size = 0x4, offset = 0x4, fixed_abs, tag = 'smem constant byte address 0x4 - core index']
  #allocation1 [shape = 'u32[144,128]{1,0:T(1,128)}', space=vmem, size = 0x12000, scoped, tag = 'internal scratch']
  %s0 = inlined_call_operand.vmem [shape: f32[2,16,128], index: 0, kind: input, shape index: {}]
  %s1 = inlined_call_operand.vmem [shape: f32[1,1,128], index: 1, kind: input, shape index: {}]
  %s2 = inlined_call_operand.vmem [shape: f32[1,1,128], index: 2, kind: input, shape index: {}]
  %s3 = inlined_call_operand.vmem [shape: f32[2,16,128], index: 3, kind: output, shape index: {}]
  %s4 = sld [smem:[#allocation0]]
  $region45: #{conv_synbn_relu_forward.3} parent=0
    _
  %s6 = ssub.s32 1, %s4
  %s7 = scalar_select 0, %s6, %s4
  loop: start=0, step=1, limit=4
  $region2: #{conv_synbn_relu_forward.3} parent=0 // loop_pre_header
    _
  $region3: #{conv_synbn_relu_forward.3} parent=0 // loop_header
    %s9 = sphi 0, %s13
    %p10 = scmp.ge.s32.totalorder %s9, 4
    %s19 = sphi 0, %s21
    %s22 = sphi 0, %s19
    %s23 = sphi 0, %s22
    %s39 = sphi 0, %s23
    %s43 = sphi 0, %s43
    %s45 = sphi 0, %s43
    %s46 = sphi 0, %s45
    %s60 = sphi 0, %s46
    %s64 = sphi 0, %s64
    %s66 = sphi 0, %s64
    %s67 = sphi 0, %s66
    %s81 = sphi 0, %s67
    %s87 = sphi 0, %s89
    %s90 = sphi 0, %s87
    %s91 = sphi 0, %s90
    %s107 = sphi 0, %s91
  $region4: #{conv_synbn_relu_forward.3} parent=0 // loop_header_branch
    %12 = sbr.rel (%p10) target = $region8
  $region5: #{conv_synbn_relu_forward.3} parent=0 // loop_body
    %s14 = ssub.s32 %s9, 1
    %s15 = ssub.s32 %s9, 2
    %s16 = sadd.s32 %s9, 1
    %s17 = ssub.s32 %s9, %s16
    %p18 = scmp.eq.s32.totalorder %s17, 0
    %s20 = sadd.s32 %s19, 1
    %s21 = scalar_select %p18, %s19, %s20
    %p24 = pneg %p18
    %p25 = scmp.eq.s32.totalorder %s9, 1
    %p26 = por %p24, %p25
    %p27 = scmp.ne.s32.totalorder %s19, %s22
    %p28 = scmp.eq.s32.totalorder %s9, 0
    %p29 = por %p27, %p28
    %p30 = scmp.ne.s32.totalorder %s19, %s22
    %p31 = scmp.eq.s32.totalorder %s14, 1
    %p32 = por %p30, %p31
    %p33 = scmp.ne.s32.totalorder %s22, %s23
    %p34 = scmp.eq.s32.totalorder %s14, 0
    %p35 = por %p33, %p34
    %p36 = scmp.ne.s32.totalorder %s22, %s23
    %p37 = scmp.eq.s32.totalorder %s15, 1
    %p38 = por %p36, %p37
    %p40 = scmp.ne.s32.totalorder %s23, %s39
    %p41 = scmp.eq.s32.totalorder %s15, 0
    %p42 = por %p40, %p41
    %s44 = sadd.s32 %s43, 1
    %p47 = scmp.eq.s32.totalorder %s9, 1
    %p48 = scmp.ne.s32.totalorder %s43, %s45
    %p49 = scmp.eq.s32.totalorder %s9, 0
    %p50 = por %p48, %p49
    %p51 = scmp.ne.s32.totalorder %s43, %s45
    %p52 = scmp.eq.s32.totalorder %s14, 1
    %p53 = por %p51, %p52
    %p54 = scmp.ne.s32.totalorder %s45, %s46
    %p55 = scmp.eq.s32.totalorder %s14, 0
    %p56 = por %p54, %p55
    %p57 = scmp.ne.s32.totalorder %s45, %s46
    %p58 = scmp.eq.s32.totalorder %s15, 1
    %p59 = por %p57, %p58
    %p61 = scmp.ne.s32.totalorder %s46, %s60
    %p62 = scmp.eq.s32.totalorder %s15, 0
    %p63 = por %p61, %p62
    %s65 = sadd.s32 %s64, 1
    %p68 = scmp.eq.s32.totalorder %s9, 1
    %p69 = scmp.ne.s32.totalorder %s64, %s66
    %p70 = scmp.eq.s32.totalorder %s9, 0
    %p71 = por %p69, %p70
    %p72 = scmp.ne.s32.totalorder %s64, %s66
    %p73 = scmp.eq.s32.totalorder %s14, 1
    %p74 = por %p72, %p73
    %p75 = scmp.ne.s32.totalorder %s66, %s67
    %p76 = scmp.eq.s32.totalorder %s14, 0
    %p77 = por %p75, %p76
    %p78 = scmp.ne.s32.totalorder %s66, %s67
    %p79 = scmp.eq.s32.totalorder %s15, 1
    %p80 = por %p78, %p79
    %p82 = scmp.ne.s32.totalorder %s67, %s81
    %p83 = scmp.eq.s32.totalorder %s15, 0
    %p84 = por %p82, %p83
    %s85 = ssub.s32 %s9, %s16
    %p86 = scmp.eq.s32.totalorder %s85, 0
    %s88 = sadd.s32 %s87, 1
    %s89 = scalar_select %p86, %s87, %s88
    %p92 = pneg %p86
    %p93 = scmp.eq.s32.totalorder %s9, 1
    %p94 = por %p92, %p93
    %p95 = scmp.ne.s32.totalorder %s87, %s90
    %p96 = scmp.eq.s32.totalorder %s9, 0
    %p97 = por %p95, %p96
    %p98 = scmp.ne.s32.totalorder %s87, %s90
    %p99 = scmp.eq.s32.totalorder %s14, 1
    %p100 = por %p98, %p99
    %p101 = scmp.ne.s32.totalorder %s90, %s91
    %p102 = scmp.eq.s32.totalorder %s14, 0
    %p103 = por %p101, %p102
    %p104 = scmp.ne.s32.totalorder %s90, %s91
    %p105 = scmp.eq.s32.totalorder %s15, 1
    %p106 = por %p104, %p105
    %p108 = scmp.ne.s32.totalorder %s91, %s107
    %p109 = scmp.eq.s32.totalorder %s15, 0
    %p110 = por %p108, %p109
    %p111 = scmp.le.s32.totalorder 1, %s9
    %p112 = scmp.lt.s32.totalorder %s9, 3
    %p113 = pnand %p111, %p112
    %p114 = pneg %p113
    // Predicated region
    $region9: #{conv_synbn_relu_forward.3} parent=5 // pred_check
      _
    $region10: #{conv_synbn_relu_forward.3} parent=5 // pred_check_branch
      %116 = sbr.rel (%p113) target = $region12
    $region11: #{conv_synbn_relu_forward.3} parent=5 // pred_region
      %s117 = ssub.s32 %s9, 1
      // Predicated region
      $region13: #{conv_synbn_relu_forward.3} parent=11 // pred_check
        %p118 = pneg %p56
      $region14: #{conv_synbn_relu_forward.3} parent=11 // pred_check_branch
        %120 = sbr.rel (%p118) target = $region16
      $region15: #{conv_synbn_relu_forward.3} parent=11 // pred_region
        _
      $region16: #{conv_synbn_relu_forward.3} parent=11 // pred_fallthru
        _
      // Predicated region
      $region17: #{conv_synbn_relu_forward.3} parent=11 // pred_check
        %p121 = pneg %p77
      $region18: #{conv_synbn_relu_forward.3} parent=11 // pred_check_branch
        %123 = sbr.rel (%p121) target = $region20
      $region19: #{conv_synbn_relu_forward.3} parent=11 // pred_region
        _
      $region20: #{conv_synbn_relu_forward.3} parent=11 // pred_fallthru
        _
    $region12: #{conv_synbn_relu_forward.3} parent=5 // pred_fallthru
      _
    %p124 = scmp.lt.s32.totalorder %s9, 2
    // Predicated region
    $region21: #{conv_synbn_relu_forward.3} parent=5 // pred_check
      %p125 = pneg %p124
    $region22: #{conv_synbn_relu_forward.3} parent=5 // pred_check_branch
      %127 = sbr.rel (%p125) target = $region24
    $region23: #{conv_synbn_relu_forward.3} parent=5 // pred_region
      // Predicated region
      $region25: #{conv_synbn_relu_forward.3} parent=23 // pred_check
        %p128 = pneg %p29
      $region26: #{conv_synbn_relu_forward.3} parent=23 // pred_check_branch
        %130 = sbr.rel (%p128) target = $region28
      $region27: #{conv_synbn_relu_forward.3} parent=23 // pred_region
        %p131 = scmp.lt.s32.totalorder %s9, 1
        %s132 = scalar_select %p131, %s9, 1
        %s133 = smul.addr %s132, 2
        %s134 = smul.addr %s133, 8
        %s135 = scalar_lea.vmem %s0, %s134
      $region28: #{conv_synbn_relu_forward.3} parent=23 // pred_fallthru
        _
    $region24: #{conv_synbn_relu_forward.3} parent=5 // pred_fallthru
      _
    %p136 = scmp.le.s32.totalorder 1, %s9
    %p137 = scmp.lt.s32.totalorder %s9, 3
    %p138 = pnand %p136, %p137
    %p139 = pneg %p138
    // Predicated region
    $region29: #{conv_synbn_relu_forward.3} parent=5 // pred_check
      _
    $region30: #{conv_synbn_relu_forward.3} parent=5 // pred_check_branch
      %141 = sbr.rel (%p138) target = $region32
    $region31: #{conv_synbn_relu_forward.3} parent=5 // pred_region
      %s142 = ssub.s32 %s9, 1
      %p143 = scmp.lt.s32.totalorder %s14, 1
      %s144 = scalar_select %p143, %s14, 1
      %s145 = smul.addr %s144, 2
      %s146 = smul.addr %s145, 8
      %s147 = scalar_lea.vmem %s0, %s146
      %p148 = pneg %p35
      %p149 = pneg %p32
      %p150 = pneg %p56
      %p151 = pneg %p53
      %p152 = pneg %p77
      %p153 = pneg %p74
      %p154 = pneg %p103
      %p155 = pneg %p100
      %p156 = scmp.lt.s32.totalorder %s14, 1
      %s157 = scalar_select %p156, %s14, 1
      %s158 = smul.addr %s157, 2
      %s159 = smul.addr %s158, 8
      %s160 = scalar_lea.vmem %s3, %s159
      %p161 = scmp.lt.s32.totalorder %s14, 1
      %s162 = scalar_select %p161, %s14, 1
      %s163 = smul.addr %s162, 2
      %s164 = smul.addr %s163, 8
      %s165 = scalar_lea.vmem %s0, %s164
      %p166 = scmp.lt.s32.totalorder %s14, 1
      %s167 = scalar_select %p166, %s14, 1
      %s168 = smul.addr %s167, 2
      %s169 = smul.addr %s168, 8
      %s170 = scalar_lea.vmem %s3, %s169
      %v171 = vld [vmem:[%s165] sm:$0xff]
      %v172 = vld [vmem:[%s165 + $0x8] sm:$0xff]
      %v173 = vld [vmem:[%s1] sm:$0x1]
      %v175 = vlaneseq
      %v176 = vshrl.u32 %v175, 7
      %v177 = vsub.s32 0, %v176
      %v178 = vrot.slane %v173, %v177
      %v180 = vmul.f32 %v171, %v178
      %v181 = vmul.f32 %v172, %v178
      %v182 = vld [vmem:[%s2] sm:$0x1]
      %v184 = vlaneseq
      %v185 = vshrl.u32 %v184, 7
      %v186 = vsub.s32 0, %v185
      %v187 = vrot.slane %v182, %v186
      %v189 = vadd.f32 %v180, %v187
      %v190 = vadd.f32 %v181, %v187
      %v191 = vmax.f32 %v189, 0.0
      %v192 = vmax.f32 %v190, 0.0
      %193 = vst [vmem:[%s170] sm:$0xff] %v191
      %194 = vst [vmem:[%s170 + $0x8] sm:$0xff] %v192
      %p195 = scmp.lt.s32.totalorder %s14, 1
      %s196 = scalar_select %p195, %s14, 1
      %s197 = smul.addr %s196, 2
      %s198 = smul.addr %s197, 8
      %s199 = scalar_lea.vmem %s3, %s198
      // Predicated region
      $region33: #{conv_synbn_relu_forward.3} parent=31 // pred_check
        %p200 = pneg %p100
      $region34: #{conv_synbn_relu_forward.3} parent=31 // pred_check_branch
        %202 = sbr.rel (%p200) target = $region36
      $region35: #{conv_synbn_relu_forward.3} parent=31 // pred_region
        _
      $region36: #{conv_synbn_relu_forward.3} parent=31 // pred_fallthru
        _
    $region32: #{conv_synbn_relu_forward.3} parent=5 // pred_fallthru
      _
    %p203 = scmp.le.s32.totalorder 2, %s9
    // Predicated region
    $region37: #{conv_synbn_relu_forward.3} parent=5 // pred_check
      %p204 = pneg %p203
    $region38: #{conv_synbn_relu_forward.3} parent=5 // pred_check_branch
      %206 = sbr.rel (%p204) target = $region40
    $region39: #{conv_synbn_relu_forward.3} parent=5 // pred_region
      %s207 = ssub.s32 %s9, 2
      // Predicated region
      $region41: #{conv_synbn_relu_forward.3} parent=39 // pred_check
        %p208 = pneg %p106
      $region42: #{conv_synbn_relu_forward.3} parent=39 // pred_check_branch
        %210 = sbr.rel (%p208) target = $region44
      $region43: #{conv_synbn_relu_forward.3} parent=39 // pred_region
        %p211 = scmp.lt.s32.totalorder %s15, 1
        %s212 = scalar_select %p211, %s15, 1
        %s213 = smul.addr %s212, 2
        %s214 = smul.addr %s213, 8
        %s215 = scalar_lea.vmem %s3, %s214
      $region44: #{conv_synbn_relu_forward.3} parent=39 // pred_fallthru
        _
    $region40: #{conv_synbn_relu_forward.3} parent=5 // pred_fallthru
      _
  $region6: #{conv_synbn_relu_forward.3} parent=0 // loop_footer
    %s13 = sadd.s32 1, %s9
  $region7: #{conv_synbn_relu_forward.3} parent=0 // loop_footer_branch
    %8 = sbr.rel target = $region3
  $region8: #{conv_synbn_relu_forward.3} parent=0 // loop_exit
    _

// kernel: conv_synbn_relu_forward.2
$region0: #{conv_synbn_relu_forward.2}
  #allocation0 [shape = 'u32[]', space=smem, size = 0x4, offset = 0x4, fixed_abs, tag = 'smem constant byte address 0x4 - core index']
  #allocation1 [shape = 'u32[144,128]{1,0:T(1,128)}', space=vmem, size = 0x12000, scoped, tag = 'internal scratch']
  #allocation2 [shape = 'f32[16,16,36]{2,1,0:T(8,128)}', space=vmem, size = 0x20000, scoped, tag = 'scratch operand']
  %s0 = inlined_call_operand.vmem [shape: f32[2,16,16,4], index: 0, kind: input, shape index: {}]
  %s1 = inlined_call_operand.vmem [shape: bf16[36,8], index: 1, kind: input, shape index: {}]
  %s2 = inlined_call_operand.vmem [shape: f32[1,8], index: 2, kind: input, shape index: {}]
  %s3 = inlined_call_operand.vmem [shape: f32[2,16,16,8], index: 3, kind: output, shape index: {0}]
  %s4 = inlined_call_operand.vmem [shape: f32[2,2,8], index: 4, kind: output, shape index: {1}]
  %5 = xla_tuple %s3, %s4
  %s6 = sld [smem:[#allocation0]]
  $region53: #{conv_synbn_relu_forward.2} parent=0
    _
  %s8 = ssub.s32 1, %s6
  %s9 = scalar_select 0, %s8, %s6
  loop: start=0, step=1, limit=4
  $region2: #{conv_synbn_relu_forward.2} parent=0 // loop_pre_header
    _
  $region3: #{conv_synbn_relu_forward.2} parent=0 // loop_header
    %s11 = sphi 0, %s15
    %p12 = scmp.ge.s32.totalorder %s11, 4
    %s21 = sphi 0, %s23
    %s24 = sphi 0, %s21
    %s25 = sphi 0, %s24
    %s41 = sphi 0, %s25
    %s45 = sphi 0, %s45
    %s47 = sphi 0, %s45
    %s48 = sphi 0, %s47
    %s62 = sphi 0, %s48
    %s66 = sphi 0, %s66
    %s68 = sphi 0, %s66
    %s69 = sphi 0, %s68
    %s83 = sphi 0, %s69
    %s89 = sphi 0, %s91
    %s92 = sphi 0, %s89
    %s93 = sphi 0, %s92
    %s109 = sphi 0, %s93
    %s115 = sphi 0, %s117
    %s118 = sphi 0, %s115
    %s119 = sphi 0, %s118
    %s135 = sphi 0, %s119
  $region4: #{conv_synbn_relu_forward.2} parent=0 // loop_header_branch
    %14 = sbr.rel (%p12) target = $region8
  $region5: #{conv_synbn_relu_forward.2} parent=0 // loop_body
    %s16 = ssub.s32 %s11, 1
    %s17 = ssub.s32 %s11, 2
    %s18 = sadd.s32 %s11, 1
    %s19 = ssub.s32 %s11, %s18
    %p20 = scmp.eq.s32.totalorder %s19, 0
    %s22 = sadd.s32 %s21, 1
    %s23 = scalar_select %p20, %s21, %s22
    %p26 = pneg %p20
    %p27 = scmp.eq.s32.totalorder %s11, 1
    %p28 = por %p26, %p27
    %p29 = scmp.ne.s32.totalorder %s21, %s24
    %p30 = scmp.eq.s32.totalorder %s11, 0
    %p31 = por %p29, %p30
    %p32 = scmp.ne.s32.totalorder %s21, %s24
    %p33 = scmp.eq.s32.totalorder %s16, 1
    %p34 = por %p32, %p33
    %p35 = scmp.ne.s32.totalorder %s24, %s25
    %p36 = scmp.eq.s32.totalorder %s16, 0
    %p37 = por %p35, %p36
    %p38 = scmp.ne.s32.totalorder %s24, %s25
    %p39 = scmp.eq.s32.totalorder %s17, 1
    %p40 = por %p38, %p39
    %p42 = scmp.ne.s32.totalorder %s25, %s41
    %p43 = scmp.eq.s32.totalorder %s17, 0
    %p44 = por %p42, %p43
    %s46 = sadd.s32 %s45, 1
    %p49 = scmp.eq.s32.totalorder %s11, 1
    %p50 = scmp.ne.s32.totalorder %s45, %s47
    %p51 = scmp.eq.s32.totalorder %s11, 0
    %p52 = por %p50, %p51
    %p53 = scmp.ne.s32.totalorder %s45, %s47
    %p54 = scmp.eq.s32.totalorder %s16, 1
    %p55 = por %p53, %p54
    %p56 = scmp.ne.s32.totalorder %s47, %s48
    %p57 = scmp.eq.s32.totalorder %s16, 0
    %p58 = por %p56, %p57
    %p59 = scmp.ne.s32.totalorder %s47, %s48
    %p60 = scmp.eq.s32.totalorder %s17, 1
    %p61 = por %p59, %p60
    %p63 = scmp.ne.s32.totalorder %s48, %s62
    %p64 = scmp.eq.s32.totalorder %s17, 0
    %p65 = por %p63, %p64
    %s67 = sadd.s32 %s66, 1
    %p70 = scmp.eq.s32.totalorder %s11, 1
    %p71 = scmp.ne.s32.totalorder %s66, %s68
    %p72 = scmp.eq.s32.totalorder %s11, 0
    %p73 = por %p71, %p72
    %p74 = scmp.ne.s32.totalorder %s66, %s68
    %p75 = scmp.eq.s32.totalorder %s16, 1
    %p76 = por %p74, %p75
    %p77 = scmp.ne.s32.totalorder %s68, %s69
    %p78 = scmp.eq.s32.totalorder %s16, 0
    %p79 = por %p77, %p78
    %p80 = scmp.ne.s32.totalorder %s68, %s69
    %p81 = scmp.eq.s32.totalorder %s17, 1
    %p82 = por %p80, %p81
    %p84 = scmp.ne.s32.totalorder %s69, %s83
    %p85 = scmp.eq.s32.totalorder %s17, 0
    %p86 = por %p84, %p85
    %s87 = ssub.s32 %s11, %s18
    %p88 = scmp.eq.s32.totalorder %s87, 0
    %s90 = sadd.s32 %s89, 1
    %s91 = scalar_select %p88, %s89, %s90
    %p94 = pneg %p88
    %p95 = scmp.eq.s32.totalorder %s11, 1
    %p96 = por %p94, %p95
    %p97 = scmp.ne.s32.totalorder %s89, %s92
    %p98 = scmp.eq.s32.totalorder %s11, 0
    %p99 = por %p97, %p98
    %p100 = scmp.ne.s32.totalorder %s89, %s92
    %p101 = scmp.eq.s32.totalorder %s16, 1
    %p102 = por %p100, %p101
    %p103 = scmp.ne.s32.totalorder %s92, %s93
    %p104 = scmp.eq.s32.totalorder %s16, 0
    %p105 = por %p103, %p104
    %p106 = scmp.ne.s32.totalorder %s92, %s93
    %p107 = scmp.eq.s32.totalorder %s17, 1
    %p108 = por %p106, %p107
    %p110 = scmp.ne.s32.totalorder %s93, %s109
    %p111 = scmp.eq.s32.totalorder %s17, 0
    %p112 = por %p110, %p111
    %s113 = ssub.s32 %s11, %s18
    %p114 = scmp.eq.s32.totalorder %s113, 0
    %s116 = sadd.s32 %s115, 1
    %s117 = scalar_select %p114, %s115, %s116
    %p120 = pneg %p114
    %p121 = scmp.eq.s32.totalorder %s11, 1
    %p122 = por %p120, %p121
    %p123 = scmp.ne.s32.totalorder %s115, %s118
    %p124 = scmp.eq.s32.totalorder %s11, 0
    %p125 = por %p123, %p124
    %p126 = scmp.ne.s32.totalorder %s115, %s118
    %p127 = scmp.eq.s32.totalorder %s16, 1
    %p128 = por %p126, %p127
    %p129 = scmp.ne.s32.totalorder %s118, %s119
    %p130 = scmp.eq.s32.totalorder %s16, 0
    %p131 = por %p129, %p130
    %p132 = scmp.ne.s32.totalorder %s118, %s119
    %p133 = scmp.eq.s32.totalorder %s17, 1
    %p134 = por %p132, %p133
    %p136 = scmp.ne.s32.totalorder %s119, %s135
    %p137 = scmp.eq.s32.totalorder %s17, 0
    %p138 = por %p136, %p137
    %p139 = scmp.le.s32.totalorder 1, %s11
    %p140 = scmp.lt.s32.totalorder %s11, 3
    %p141 = pnand %p139, %p140
    %p142 = pneg %p141
    // Predicated region
    $region9: #{conv_synbn_relu_forward.2} parent=5 // pred_check
      _
    $region10: #{conv_synbn_relu_forward.2} parent=5 // pred_check_branch
      %144 = sbr.rel (%p141) target = $region12
    $region11: #{conv_synbn_relu_forward.2} parent=5 // pred_region
      %s145 = ssub.s32 %s11, 1
      // Predicated region
      $region13: #{conv_synbn_relu_forward.2} parent=11 // pred_check
        %p146 = pneg %p58
      $region14: #{conv_synbn_relu_forward.2} parent=11 // pred_check_branch
        %148 = sbr.rel (%p146) target = $region16
      $region15: #{conv_synbn_relu_forward.2} parent=11 // pred_region
        _
      $region16: #{conv_synbn_relu_forward.2} parent=11 // pred_fallthru
        _
      // Predicated region
      $region17: #{conv_synbn_relu_forward.2} parent=11 // pred_check
        %p149 = pneg %p79
      $region18: #{conv_synbn_relu_forward.2} parent=11 // pred_check_branch
        %151 = sbr.rel (%p149) target = $region20
      $region19: #{conv_synbn_relu_forward.2} parent=11 // pred_region
        _
      $region20: #{conv_synbn_relu_forward.2} parent=11 // pred_fallthru
        _
    $region12: #{conv_synbn_relu_forward.2} parent=5 // pred_fallthru
      _
    %p152 = scmp.lt.s32.totalorder %s11, 2
    // Predicated region
    $region21: #{conv_synbn_relu_forward.2} parent=5 // pred_check
      %p153 = pneg %p152
    $region22: #{conv_synbn_relu_forward.2} parent=5 // pred_check_branch
      %155 = sbr.rel (%p153) target = $region24
    $region23: #{conv_synbn_relu_forward.2} parent=5 // pred_region
      // Predicated region
      $region25: #{conv_synbn_relu_forward.2} parent=23 // pred_check
        %p156 = pneg %p31
      $region26: #{conv_synbn_relu_forward.2} parent=23 // pred_check_branch
        %158 = sbr.rel (%p156) target = $region28
      $region27: #{conv_synbn_relu_forward.2} parent=23 // pred_region
        %p159 = scmp.lt.s32.totalorder %s11, 1
        %s160 = scalar_select %p159, %s11, 1
        %s161 = smul.addr %s160, 32
        %s162 = smul.addr %s161, 8
        %s163 = scalar_lea.vmem %s0, %s162
      $region28: #{conv_synbn_relu_forward.2} parent=23 // pred_fallthru
        _
    $region24: #{conv_synbn_relu_forward.2} parent=5 // pred_fallthru
      _
    %p164 = scmp.le.s32.totalorder 1, %s11
    %p165 = scmp.lt.s32.totalorder %s11, 3
    %p166 = pnand %p164, %p165
    %p167 = pneg %p166
    // Predicated region
    $region29: #{conv_synbn_relu_forward.2} parent=5 // pred_check
      _
    $region30: #{conv_synbn_relu_forward.2} parent=5 // pred_check_branch
      %169 = sbr.rel (%p166) target = $region32
    $region31: #{conv_synbn_relu_forward.2} parent=5 // pred_region
      %s170 = ssub.s32 %s11, 1
      %p171 = scmp.lt.s32.totalorder %s16, 1
      %s172 = scalar_select %p171, %s16, 1
      %s173 = smul.addr %s172, 32
      %s174 = smul.addr %s173, 8
      %s175 = scalar_lea.vmem %s0, %s174
      %p176 = pneg %p37
      %p177 = pneg %p34
      %p178 = pneg %p58
      %p179 = pneg %p55
      %p180 = pneg %p79
      %p181 = pneg %p76
      %p182 = pneg %p105
      %p183 = pneg %p102
      %p184 = scmp.lt.s32.totalorder %s16, 1
      %s185 = scalar_select %p184, %s16, 1
      %s186 = smul.addr %s185, 32
      %s187 = smul.addr %s186, 8
      %s188 = scalar_lea.vmem %s3, %s187
      %p189 = pneg %p131
      %p190 = pneg %p128
      %p191 = scmp.lt.s32.totalorder %s16, 1
      %s192 = scalar_select %p191, %s16, 1
      %s193 = smul.addr %s192, 2
      %s194 = scalar_lea.vmem %s4, %s193
      %p195 = scmp.lt.s32.totalorder %s16, 1
      %s196 = scalar_select %p195, %s16, 1
      %s197 = smul.addr %s196, 32
      %s198 = smul.addr %s197, 8
      %s199 = scalar_lea.vmem %s0, %s198
      %p200 = scmp.lt.s32.totalorder %s16, 1
      %s201 = scalar_select %p200, %s16, 1
      %s202 = smul.addr %s201, 32
      %s203 = smul.addr %s202, 8
      %s204 = scalar_lea.vmem %s3, %s203
      %p205 = scmp.lt.s32.totalorder %s16, 1
      %s206 = scalar_select %p205, %s16, 1
      %s207 = smul.addr %s206, 2
      %s208 = scalar_lea.vmem %s4, %s207
      %vm210 = vcmask 293888
      %211 = vst.msk [vmem:[#allocation2] sm:$0xff] %vm210, 0.0
      %212 = vst.msk [vmem:[#allocation2 + $0x8] sm:$0xff] %vm210, 0.0
      %213 = vst.msk [vmem:[#allocation2 + $0x10] sm:$0xff] %vm210, 0.0
      %214 = vst.msk [vmem:[#allocation2 + $0x18] sm:$0xff] %vm210, 0.0
      %215 = vst.msk [vmem:[#allocation2 + $0x20] sm:$0xff] %vm210, 0.0
      %216 = vst.msk [vmem:[#allocation2 + $0x28] sm:$0xff] %vm210, 0.0
      %217 = vst.msk [vmem:[#allocation2 + $0x30] sm:$0xff] %vm210, 0.0
      %218 = vst.msk [vmem:[#allocation2 + $0x38] sm:$0xff] %vm210, 0.0
      %219 = vst.msk [vmem:[#allocation2 + $0x40] sm:$0xff] %vm210, 0.0
      %220 = vst.msk [vmem:[#allocation2 + $0x48] sm:$0xff] %vm210, 0.0
      %221 = vst.msk [vmem:[#allocation2 + $0x50] sm:$0xff] %vm210, 0.0
      %222 = vst.msk [vmem:[#allocation2 + $0x58] sm:$0xff] %vm210, 0.0
      %223 = vst.msk [vmem:[#allocation2 + $0x60] sm:$0xff] %vm210, 0.0
      %224 = vst.msk [vmem:[#allocation2 + $0x68] sm:$0xff] %vm210, 0.0
      %225 = vst.msk [vmem:[#allocation2 + $0x70] sm:$0xff] %vm210, 0.0
      %226 = vst.msk [vmem:[#allocation2 + $0x78] sm:$0xff] %vm210, 0.0
      %227 = vst.msk [vmem:[#allocation2 + $0x80] sm:$0xff] %vm210, 0.0
      %228 = vst.msk [vmem:[#allocation2 + $0x88] sm:$0xff] %vm210, 0.0
      %229 = vst.msk [vmem:[#allocation2 + $0x90] sm:$0xff] %vm210, 0.0
      %230 = vst.msk [vmem:[#allocation2 + $0x98] sm:$0xff] %vm210, 0.0
      %231 = vst.msk [vmem:[#allocation2 + $0xa0] sm:$0xff] %vm210, 0.0
      %232 = vst.msk [vmem:[#allocation2 + $0xa8] sm:$0xff] %vm210, 0.0
      %233 = vst.msk [vmem:[#allocation2 + $0xb0] sm:$0xff] %vm210, 0.0
      %234 = vst.msk [vmem:[#allocation2 + $0xb8] sm:$0xff] %vm210, 0.0
      %235 = vst.msk [vmem:[#allocation2 + $0xc0] sm:$0xff] %vm210, 0.0
      %236 = vst.msk [vmem:[#allocation2 + $0xc8] sm:$0xff] %vm210, 0.0
      %237 = vst.msk [vmem:[#allocation2 + $0xd0] sm:$0xff] %vm210, 0.0
      %238 = vst.msk [vmem:[#allocation2 + $0xd8] sm:$0xff] %vm210, 0.0
      %239 = vst.msk [vmem:[#allocation2 + $0xe0] sm:$0xff] %vm210, 0.0
      %240 = vst.msk [vmem:[#allocation2 + $0xe8] sm:$0xff] %vm210, 0.0
      %241 = vst.msk [vmem:[#allocation2 + $0xf0] sm:$0xff] %vm210, 0.0
      %242 = vst.msk [vmem:[#allocation2 + $0xf8] sm:$0xff] %vm210, 0.0
      %v243 = vld [vmem:[%s199] sm:$0xff]
      %v244 = vld [vmem:[%s199 + $0x8] sm:$0x7f]
      %v245 = vld [vmem:[%s199 + $0x10] sm:$0xff]
      %v246 = vld [vmem:[%s199 + $0x18] sm:$0x7f]
      %v247 = vld [vmem:[%s199 + $0x20] sm:$0xff]
      %v248 = vld [vmem:[%s199 + $0x28] sm:$0x7f]
      %v249 = vld [vmem:[%s199 + $0x30] sm:$0xff]
      %v250 = vld [vmem:[%s199 + $0x38] sm:$0x7f]
      %v251 = vld [vmem:[%s199 + $0x40] sm:$0xff]
      %v252 = vld [vmem:[%s199 + $0x48] sm:$0x7f]
      %v253 = vld [vmem:[%s199 + $0x50] sm:$0xff]
      %v254 = vld [vmem:[%s199 + $0x58] sm:$0x7f]
      %v255 = vld [vmem:[%s199 + $0x60] sm:$0xff]
      %v256 = vld [vmem:[%s199 + $0x68] sm:$0x7f]
      %v257 = vld [vmem:[%s199 + $0x70] sm:$0xff]
      %v258 = vld [vmem:[%s199 + $0x78] sm:$0x7f]
      %v259 = vld [vmem:[%s199 + $0x80] sm:$0xff]
      %v260 = vld [vmem:[%s199 + $0x88] sm:$0x7f]
      %v261 = vld [vmem:[%s199 + $0x90] sm:$0xff]
      %v262 = vld [vmem:[%s199 + $0x98] sm:$0x7f]
      %v263 = vld [vmem:[%s199 + $0xa0] sm:$0xff]
      %v264 = vld [vmem:[%s199 + $0xa8] sm:$0x7f]
      %v265 = vld [vmem:[%s199 + $0xb0] sm:$0xff]
      %v266 = vld [vmem:[%s199 + $0xb8] sm:$0x7f]
      %v267 = vld [vmem:[%s199 + $0xc0] sm:$0xff]
      %v268 = vld [vmem:[%s199 + $0xc8] sm:$0x7f]
      %v269 = vld [vmem:[%s199 + $0xd0] sm:$0xff]
      %v270 = vld [vmem:[%s199 + $0xd8] sm:$0x7f]
      %v271 = vld [vmem:[%s199 + $0xe0] sm:$0xff]
      %v272 = vld [vmem:[%s199 + $0xe8] sm:$0x7f]
      %s273 = scalar_lea.vmem [#allocation2], 16
      %vm274 = vcmask 31744
      %275 = vst.msk [vmem:[%s273 + $0x1] sm:$0xff] %vm274, %v243
      %vm276 = vcmask 30720
      %277 = vst.msk [vmem:[%s273 + $0x9] sm:$0x7f] %vm276, %v244
      %278 = vst.msk [vmem:[%s273 + $0x11] sm:$0xff] %vm274, %v245
      %279 = vst.msk [vmem:[%s273 + $0x19] sm:$0x7f] %vm276, %v246
      %280 = vst.msk [vmem:[%s273 + $0x21] sm:$0xff] %vm274, %v247
      %281 = vst.msk [vmem:[%s273 + $0x29] sm:$0x7f] %vm276, %v248
      %282 = vst.msk [vmem:[%s273 + $0x31] sm:$0xff] %vm274, %v249
      %283 = vst.msk [vmem:[%s273 + $0x39] sm:$0x7f] %vm276, %v250
      %284 = vst.msk [vmem:[%s273 + $0x41] sm:$0xff] %vm274, %v251
      %285 = vst.msk [vmem:[%s273 + $0x49] sm:$0x7f] %vm276, %v252
      %286 = vst.msk [vmem:[%s273 + $0x51] sm:$0xff] %vm274, %v253
      %287 = vst.msk [vmem:[%s273 + $0x59] sm:$0x7f] %vm276, %v254
      %288 = vst.msk [vmem:[%s273 + $0x61] sm:$0xff] %vm274, %v255
      %289 = vst.msk [vmem:[%s273 + $0x69] sm:$0x7f] %vm276, %v256
      %290 = vst.msk [vmem:[%s273 + $0x71] sm:$0xff] %vm274, %v257
      %291 = vst.msk [vmem:[%s273 + $0x79] sm:$0x7f] %vm276, %v258
      %292 = vst.msk [vmem:[%s273 + $0x81] sm:$0xff] %vm274, %v259
      %293 = vst.msk [vmem:[%s273 + $0x89] sm:$0x7f] %vm276, %v260
      %294 = vst.msk [vmem:[%s273 + $0x91] sm:$0xff] %vm274, %v261
      %295 = vst.msk [vmem:[%s273 + $0x99] sm:$0x7f] %vm276, %v262
      %296 = vst.msk [vmem:[%s273 + $0xa1] sm:$0xff] %vm274, %v263
      %297 = vst.msk [vmem:[%s273 + $0xa9] sm:$0x7f] %vm276, %v264
      %298 = vst.msk [vmem:[%s273 + $0xb1] sm:$0xff] %vm274, %v265
      %299 = vst.msk [vmem:[%s273 + $0xb9] sm:$0x7f] %vm276, %v266
      %300 = vst.msk [vmem:[%s273 + $0xc1] sm:$0xff] %vm274, %v267
      %301 = vst.msk [vmem:[%s273 + $0xc9] sm:$0x7f] %vm276, %v268
      %302 = vst.msk [vmem:[%s273 + $0xd1] sm:$0xff] %vm274, %v269
      %303 = vst.msk [vmem:[%s273 + $0xd9] sm:$0x7f] %vm276, %v270
      %304 = vst.msk [vmem:[%s273 + $0xe1] sm:$0xff] %vm274, %v271
      %305 = vst.msk [vmem:[%s273 + $0xe9] sm:$0x7f] %vm276, %v272
      %v306 = vld [vmem:[%s199] sm:$0xff]
      %v307 = vld [vmem:[%s199 + $0x8] sm:$0xff]
      %v308 = vld [vmem:[%s199 + $0x10] sm:$0xff]
      %v309 = vld [vmem:[%s199 + $0x18] sm:$0xff]
      %v310 = vld [vmem:[%s199 + $0x20] sm:$0xff]
      %v311 = vld [vmem:[%s199 + $0x28] sm:$0xff]
      %v312 = vld [vmem:[%s199 + $0x30] sm:$0xff]
      %v313 = vld [vmem:[%s199 + $0x38] sm:$0xff]
      %v314 = vld [vmem:[%s199 + $0x40] sm:$0xff]
      %v315 = vld [vmem:[%s199 + $0x48] sm:$0xff]
      %v316 = vld [vmem:[%s199 + $0x50] sm:$0xff]
      %v317 = vld [vmem:[%s199 + $0x58] sm:$0xff]
      %v318 = vld [vmem:[%s199 + $0x60] sm:$0xff]
      %v319 = vld [vmem:[%s199 + $0x68] sm:$0xff]
      %v320 = vld [vmem:[%s199 + $0x70] sm:$0xff]
      %v321 = vld [vmem:[%s199 + $0x78] sm:$0xff]
      %v322 = vld [vmem:[%s199 + $0x80] sm:$0xff]
      %v323 = vld [vmem:[%s199 + $0x88] sm:$0xff]
      %v324 = vld [vmem:[%s199 + $0x90] sm:$0xff]
      %v325 = vld [vmem:[%s199 + $0x98] sm:$0xff]
      %v326 = vld [vmem:[%s199 + $0xa0] sm:$0xff]
      %v327 = vld [vmem:[%s199 + $0xa8] sm:$0xff]
      %v328 = vld [vmem:[%s199 + $0xb0] sm:$0xff]
      %v329 = vld [vmem:[%s199 + $0xb8] sm:$0xff]
      %v330 = vld [vmem:[%s199 + $0xc0] sm:$0xff]
      %v331 = vld [vmem:[%s199 + $0xc8] sm:$0xff]
      %v332 = vld [vmem:[%s199 + $0xd0] sm:$0xff]
      %v333 = vld [vmem:[%s199 + $0xd8] sm:$0xff]
      %v334 = vld [vmem:[%s199 + $0xe0] sm:$0xff]
      %v335 = vld [vmem:[%s199 + $0xe8] sm:$0xff]
      %366 = vrot.lane.b32.xlu0 %v306, 4
      %v367 = vpop.permute.xlu0 %366
      %368 = vrot.lane.b32.xlu0 %v307, 4
      %v369 = vpop.permute.xlu0 %368
      %370 = vrot.lane.b32.xlu0 %v308, 4
      %v371 = vpop.permute.xlu0 %370
      %372 = vrot.lane.b32.xlu0 %v309, 4
      %v373 = vpop.permute.xlu0 %372
      %374 = vrot.lane.b32.xlu0 %v310, 4
      %v375 = vpop.permute.xlu0 %374
      %376 = vrot.lane.b32.xlu0 %v311, 4
      %v377 = vpop.permute.xlu0 %376
      %378 = vrot.lane.b32.xlu0 %v312, 4
      %v379 = vpop.permute.xlu0 %378
      %380 = vrot.lane.b32.xlu0 %v313, 4
      %v381 = vpop.permute.xlu0 %380
      %382 = vrot.lane.b32.xlu0 %v314, 4
      %v383 = vpop.permute.xlu0 %382
      %384 = vrot.lane.b32.xlu0 %v315, 4
      %v385 = vpop.permute.xlu0 %384
      %386 = vrot.lane.b32.xlu0 %v316, 4
      %v387 = vpop.permute.xlu0 %386
      %388 = vrot.lane.b32.xlu0 %v317, 4
      %v389 = vpop.permute.xlu0 %388
      %390 = vrot.lane.b32.xlu0 %v318, 4
      %v391 = vpop.permute.xlu0 %390
      %392 = vrot.lane.b32.xlu0 %v319, 4
      %v393 = vpop.permute.xlu0 %392
      %394 = vrot.lane.b32.xlu0 %v320, 4
      %v395 = vpop.permute.xlu0 %394
      %396 = vrot.lane.b32.xlu0 %v321, 4
      %v397 = vpop.permute.xlu0 %396
      %398 = vrot.lane.b32.xlu0 %v322, 4
      %v399 = vpop.permute.xlu0 %398
      %400 = vrot.lane.b32.xlu0 %v323, 4
      %v401 = vpop.permute.xlu0 %400
      %402 = vrot.lane.b32.xlu0 %v324, 4
      %v403 = vpop.permute.xlu0 %402
      %404 = vrot.lane.b32.xlu0 %v325, 4
      %v405 = vpop.permute.xlu0 %404
      %406 = vrot.lane.b32.xlu0 %v326, 4
      %v407 = vpop.permute.xlu0 %406
      %408 = vrot.lane.b32.xlu0 %v327, 4
      %v409 = vpop.permute.xlu0 %408
      %410 = vrot.lane.b32.xlu0 %v328, 4
      %v411 = vpop.permute.xlu0 %410
      %412 = vrot.lane.b32.xlu0 %v329, 4
      %v413 = vpop.permute.xlu0 %412
      %414 = vrot.lane.b32.xlu0 %v330, 4
      %v415 = vpop.permute.xlu0 %414
      %416 = vrot.lane.b32.xlu0 %v331, 4
      %v417 = vpop.permute.xlu0 %416
      %418 = vrot.lane.b32.xlu0 %v332, 4
      %v419 = vpop.permute.xlu0 %418
      %420 = vrot.lane.b32.xlu0 %v333, 4
      %v421 = vpop.permute.xlu0 %420
      %422 = vrot.lane.b32.xlu0 %v334, 4
      %v423 = vpop.permute.xlu0 %422
      %424 = vrot.lane.b32.xlu0 %v335, 4
      %v425 = vpop.permute.xlu0 %424
      %vm456 = vcmask 64544
      %457 = vst.msk [vmem:[%s273] sm:$0xff] %vm456, %v367
      %458 = vst.msk [vmem:[%s273 + $0x8] sm:$0xff] %vm456, %v369
      %459 = vst.msk [vmem:[%s273 + $0x10] sm:$0xff] %vm456, %v371
      %460 = vst.msk [vmem:[%s273 + $0x18] sm:$0xff] %vm456, %v373
      %461 = vst.msk [vmem:[%s273 + $0x20] sm:$0xff] %vm456, %v375
      %462 = vst.msk [vmem:[%s273 + $0x28] sm:$0xff] %vm456, %v377
      %463 = vst.msk [vmem:[%s273 + $0x30] sm:$0xff] %vm456, %v379
      %464 = vst.msk [vmem:[%s273 + $0x38] sm:$0xff] %vm456, %v381
      %465 = vst.msk [vmem:[%s273 + $0x40] sm:$0xff] %vm456, %v383
      %466 = vst.msk [vmem:[%s273 + $0x48] sm:$0xff] %vm456, %v385
      %467 = vst.msk [vmem:[%s273 + $0x50] sm:$0xff] %vm456, %v387
      %468 = vst.msk [vmem:[%s273 + $0x58] sm:$0xff] %vm456, %v389
      %469 = vst.msk [vmem:[%s273 + $0x60] sm:$0xff] %vm456, %v391
      %470 = vst.msk [vmem:[%s273 + $0x68] sm:$0xff] %vm456, %v393
      %471 = vst.msk [vmem:[%s273 + $0x70] sm:$0xff] %vm456, %v395
      %472 = vst.msk [vmem:[%s273 + $0x78] sm:$0xff] %vm456, %v397
      %473 = vst.msk [vmem:[%s273 + $0x80] sm:$0xff] %vm456, %v399
      %474 = vst.msk [vmem:[%s273 + $0x88] sm:$0xff] %vm456, %v401
      %475 = vst.msk [vmem:[%s273 + $0x90] sm:$0xff] %vm456, %v403
      %476 = vst.msk [vmem:[%s273 + $0x98] sm:$0xff] %vm456, %v405
      %477 = vst.msk [vmem:[%s273 + $0xa0] sm:$0xff] %vm456, %v407
      %478 = vst.msk [vmem:[%s273 + $0xa8] sm:$0xff] %vm456, %v409
      %479 = vst.msk [vmem:[%s273 + $0xb0] sm:$0xff] %vm456, %v411
      %480 = vst.msk [vmem:[%s273 + $0xb8] sm:$0xff] %vm456, %v413
      %481 = vst.msk [vmem:[%s273 + $0xc0] sm:$0xff] %vm456, %v415
      %482 = vst.msk [vmem:[%s273 + $0xc8] sm:$0xff] %vm456, %v417
      %483 = vst.msk [vmem:[%s273 + $0xd0] sm:$0xff] %vm456, %v419
      %484 = vst.msk [vmem:[%s273 + $0xd8] sm:$0xff] %vm456, %v421
      %485 = vst.msk [vmem:[%s273 + $0xe0] sm:$0xff] %vm456, %v423
      %486 = vst.msk [vmem:[%s273 + $0xe8] sm:$0xff] %vm456, %v425
      %v487 = vld [vmem:[%s199 + $0x1] sm:$0xff]
      %v488 = vld [vmem:[%s199 + $0x9] sm:$0x7f]
      %v489 = vld [vmem:[%s199 + $0x11] sm:$0xff]
      %v490 = vld [vmem:[%s199 + $0x19] sm:$0x7f]
      %v491 = vld [vmem:[%s199 + $0x21] sm:$0xff]
      %v492 = vld [vmem:[%s199 + $0x29] sm:$0x7f]
      %v493 = vld [vmem:[%s199 + $0x31] sm:$0xff]
      %v494 = vld [vmem:[%s199 + $0x39] sm:$0x7f]
      %v495 = vld [vmem:[%s199 + $0x41] sm:$0xff]
      %v496 = vld [vmem:[%s199 + $0x49] sm:$0x7f]
      %v497 = vld [vmem:[%s199 + $0x51] sm:$0xff]
      %v498 = vld [vmem:[%s199 + $0x59] sm:$0x7f]
      %v499 = vld [vmem:[%s199 + $0x61] sm:$0xff]
      %v500 = vld [vmem:[%s199 + $0x69] sm:$0x7f]
      %v501 = vld [vmem:[%s199 + $0x71] sm:$0xff]
      %v502 = vld [vmem:[%s199 + $0x79] sm:$0x7f]
      %v503 = vld [vmem:[%s199 + $0x81] sm:$0xff]
      %v504 = vld [vmem:[%s199 + $0x89] sm:$0x7f]
      %v505 = vld [vmem:[%s199 + $0x91] sm:$0xff]
      %v506 = vld [vmem:[%s199 + $0x99] sm:$0x7f]
      %v507 = vld [vmem:[%s199 + $0xa1] sm:$0xff]
      %v508 = vld [vmem:[%s199 + $0xa9] sm:$0x7f]
      %v509 = vld [vmem:[%s199 + $0xb1] sm:$0xff]
      %v510 = vld [vmem:[%s199 + $0xb9] sm:$0x7f]
      %v511 = vld [vmem:[%s199 + $0xc1] sm:$0xff]
      %v512 = vld [vmem:[%s199 + $0xc9] sm:$0x7f]
      %v513 = vld [vmem:[%s199 + $0xd1] sm:$0xff]
      %v514 = vld [vmem:[%s199 + $0xd9] sm:$0x7f]
      %v515 = vld [vmem:[%s199 + $0xe1] sm:$0xff]
      %v516 = vld [vmem:[%s199 + $0xe9] sm:$0x7f]
      %547 = vrot.lane.b32.xlu0 %v487, 8
      %v548 = vpop.permute.xlu0 %547
      %549 = vrot.lane.b32.xlu0 %v488, 8
      %v550 = vpop.permute.xlu0 %549
      %551 = vrot.lane.b32.xlu0 %v489, 8
      %v552 = vpop.permute.xlu0 %551
      %553 = vrot.lane.b32.xlu0 %v490, 8
      %v554 = vpop.permute.xlu0 %553
      %555 = vrot.lane.b32.xlu0 %v491, 8
      %v556 = vpop.permute.xlu0 %555
      %557 = vrot.lane.b32.xlu0 %v492, 8
      %v558 = vpop.permute.xlu0 %557
      %559 = vrot.lane.b32.xlu0 %v493, 8
      %v560 = vpop.permute.xlu0 %559
      %561 = vrot.lane.b32.xlu0 %v494, 8
      %v562 = vpop.permute.xlu0 %561
      %563 = vrot.lane.b32.xlu0 %v495, 8
      %v564 = vpop.permute.xlu0 %563
      %565 = vrot.lane.b32.xlu0 %v496, 8
      %v566 = vpop.permute.xlu0 %565
      %567 = vrot.lane.b32.xlu0 %v497, 8
      %v568 = vpop.permute.xlu0 %567
      %569 = vrot.lane.b32.xlu0 %v498, 8
      %v570 = vpop.permute.xlu0 %569
      %571 = vrot.lane.b32.xlu0 %v499, 8
      %v572 = vpop.permute.xlu0 %571
      %573 = vrot.lane.b32.xlu0 %v500, 8
      %v574 = vpop.permute.xlu0 %573
      %575 = vrot.lane.b32.xlu0 %v501, 8
      %v576 = vpop.permute.xlu0 %575
      %577 = vrot.lane.b32.xlu0 %v502, 8
      %v578 = vpop.permute.xlu0 %577
      %579 = vrot.lane.b32.xlu0 %v503, 8
      %v580 = vpop.permute.xlu0 %579
      %581 = vrot.lane.b32.xlu0 %v504, 8
      %v582 = vpop.permute.xlu0 %581
      %583 = vrot.lane.b32.xlu0 %v505, 8
      %v584 = vpop.permute.xlu0 %583
      %585 = vrot.lane.b32.xlu0 %v506, 8
      %v586 = vpop.permute.xlu0 %585
      %587 = vrot.lane.b32.xlu0 %v507, 8
      %v588 = vpop.permute.xlu0 %587
      %589 = vrot.lane.b32.xlu0 %v508, 8
      %v590 = vpop.permute.xlu0 %589
      %591 = vrot.lane.b32.xlu0 %v509, 8
      %v592 = vpop.permute.xlu0 %591
      %593 = vrot.lane.b32.xlu0 %v510, 8
      %v594 = vpop.permute.xlu0 %593
      %595 = vrot.lane.b32.xlu0 %v511, 8
      %v596 = vpop.permute.xlu0 %595
      %597 = vrot.lane.b32.xlu0 %v512, 8
      %v598 = vpop.permute.xlu0 %597
      %599 = vrot.lane.b32.xlu0 %v513, 8
      %v600 = vpop.permute.xlu0 %599
      %601 = vrot.lane.b32.xlu0 %v514, 8
      %v602 = vpop.permute.xlu0 %601
      %603 = vrot.lane.b32.xlu0 %v515, 8
      %v604 = vpop.permute.xlu0 %603
      %605 = vrot.lane.b32.xlu0 %v516, 8
      %v606 = vpop.permute.xlu0 %605
      %vm637 = vcmask 97344
      %638 = vst.msk [vmem:[%s273] sm:$0xff] %vm637, %v548
      %vm639 = vcmask 96320
      %640 = vst.msk [vmem:[%s273 + $0x8] sm:$0x7f] %vm639, %v550
      %641 = vst.msk [vmem:[%s273 + $0x10] sm:$0xff] %vm637, %v552
      %642 = vst.msk [vmem:[%s273 + $0x18] sm:$0x7f] %vm639, %v554
      %643 = vst.msk [vmem:[%s273 + $0x20] sm:$0xff] %vm637, %v556
      %644 = vst.msk [vmem:[%s273 + $0x28] sm:$0x7f] %vm639, %v558
      %645 = vst.msk [vmem:[%s273 + $0x30] sm:$0xff] %vm637, %v560
      %646 = vst.msk [vmem:[%s273 + $0x38] sm:$0x7f] %vm639, %v562
      %647 = vst.msk [vmem:[%s273 + $0x40] sm:$0xff] %vm637, %v564
      %648 = vst.msk [vmem:[%s273 + $0x48] sm:$0x7f] %vm639, %v566
      %649 = vst.msk [vmem:[%s273 + $0x50] sm:$0xff] %vm637, %v568
      %650 = vst.msk [vmem:[%s273 + $0x58] sm:$0x7f] %vm639, %v570
      %651 = vst.msk [vmem:[%s273 + $0x60] sm:$0xff] %vm637, %v572
      %652 = vst.msk [vmem:[%s273 + $0x68] sm:$0x7f] %vm639, %v574
      %653 = vst.msk [vmem:[%s273 + $0x70] sm:$0xff] %vm637, %v576
      %654 = vst.msk [vmem:[%s273 + $0x78] sm:$0x7f] %vm639, %v578
      %655 = vst.msk [vmem:[%s273 + $0x80] sm:$0xff] %vm637, %v580
      %656 = vst.msk [vmem:[%s273 + $0x88] sm:$0x7f] %vm639, %v582
      %657 = vst.msk [vmem:[%s273 + $0x90] sm:$0xff] %vm637, %v584
      %658 = vst.msk [vmem:[%s273 + $0x98] sm:$0x7f] %vm639, %v586
      %659 = vst.msk [vmem:[%s273 + $0xa0] sm:$0xff] %vm637, %v588
      %660 = vst.msk [vmem:[%s273 + $0xa8] sm:$0x7f] %vm639, %v590
      %661 = vst.msk [vmem:[%s273 + $0xb0] sm:$0xff] %vm637, %v592
      %662 = vst.msk [vmem:[%s273 + $0xb8] sm:$0x7f] %vm639, %v594
      %663 = vst.msk [vmem:[%s273 + $0xc0] sm:$0xff] %vm637, %v596
      %664 = vst.msk [vmem:[%s273 + $0xc8] sm:$0x7f] %vm639, %v598
      %665 = vst.msk [vmem:[%s273 + $0xd0] sm:$0xff] %vm637, %v600
      %666 = vst.msk [vmem:[%s273 + $0xd8] sm:$0x7f] %vm639, %v602
      %667 = vst.msk [vmem:[%s273 + $0xe0] sm:$0xff] %vm637, %v604
      %668 = vst.msk [vmem:[%s273 + $0xe8] sm:$0x7f] %vm639, %v606
      %v669 = vld [vmem:[%s199] sm:$0xff]
      %v670 = vld [vmem:[%s199 + $0x8] sm:$0x7f]
      %v671 = vld [vmem:[%s199 + $0x10] sm:$0xff]
      %v672 = vld [vmem:[%s199 + $0x18] sm:$0x7f]
      %v673 = vld [vmem:[%s199 + $0x20] sm:$0xff]
      %v674 = vld [vmem:[%s199 + $0x28] sm:$0x7f]
      %v675 = vld [vmem:[%s199 + $0x30] sm:$0xff]
      %v676 = vld [vmem:[%s199 + $0x38] sm:$0x7f]
      %v677 = vld [vmem:[%s199 + $0x40] sm:$0xff]
      %v678 = vld [vmem:[%s199 + $0x48] sm:$0x7f]
      %v679 = vld [vmem:[%s199 + $0x50] sm:$0xff]
      %v680 = vld [vmem:[%s199 + $0x58] sm:$0x7f]
      %v681 = vld [vmem:[%s199 + $0x60] sm:$0xff]
      %v682 = vld [vmem:[%s199 + $0x68] sm:$0x7f]
      %v683 = vld [vmem:[%s199 + $0x70] sm:$0xff]
      %v684 = vld [vmem:[%s199 + $0x78] sm:$0x7f]
      %v685 = vld [vmem:[%s199 + $0x80] sm:$0xff]
      %v686 = vld [vmem:[%s199 + $0x88] sm:$0x7f]
      %v687 = vld [vmem:[%s199 + $0x90] sm:$0xff]
      %v688 = vld [vmem:[%s199 + $0x98] sm:$0x7f]
      %v689 = vld [vmem:[%s199 + $0xa0] sm:$0xff]
      %v690 = vld [vmem:[%s199 + $0xa8] sm:$0x7f]
      %v691 = vld [vmem:[%s199 + $0xb0] sm:$0xff]
      %v692 = vld [vmem:[%s199 + $0xb8] sm:$0x7f]
      %v693 = vld [vmem:[%s199 + $0xc0] sm:$0xff]
      %v694 = vld [vmem:[%s199 + $0xc8] sm:$0x7f]
      %v695 = vld [vmem:[%s199 + $0xd0] sm:$0xff]
      %v696 = vld [vmem:[%s199 + $0xd8] sm:$0x7f]
      %v697 = vld [vmem:[%s199 + $0xe0] sm:$0xff]
      %v698 = vld [vmem:[%s199 + $0xe8] sm:$0x7f]
      %v699 = vld [vmem:[%s199 + $0xf0] sm:$0xff]
      %v700 = vld [vmem:[%s199 + $0xf8] sm:$0x7f]
      %733 = vrot.lane.b32.xlu0 %v669, 12
      %v734 = vpop.permute.xlu0 %733
      %735 = vrot.lane.b32.xlu0 %v670, 12
      %v736 = vpop.permute.xlu0 %735
      %737 = vrot.lane.b32.xlu0 %v671, 12
      %v738 = vpop.permute.xlu0 %737
      %739 = vrot.lane.b32.xlu0 %v672, 12
      %v740 = vpop.permute.xlu0 %739
      %741 = vrot.lane.b32.xlu0 %v673, 12
      %v742 = vpop.permute.xlu0 %741
      %743 = vrot.lane.b32.xlu0 %v674, 12
      %v744 = vpop.permute.xlu0 %743
      %745 = vrot.lane.b32.xlu0 %v675, 12
      %v746 = vpop.permute.xlu0 %745
      %747 = vrot.lane.b32.xlu0 %v676, 12
      %v748 = vpop.permute.xlu0 %747
      %749 = vrot.lane.b32.xlu0 %v677, 12
      %v750 = vpop.permute.xlu0 %749
      %751 = vrot.lane.b32.xlu0 %v678, 12
      %v752 = vpop.permute.xlu0 %751
      %753 = vrot.lane.b32.xlu0 %v679, 12
      %v754 = vpop.permute.xlu0 %753
      %755 = vrot.lane.b32.xlu0 %v680, 12
      %v756 = vpop.permute.xlu0 %755
      %757 = vrot.lane.b32.xlu0 %v681, 12
      %v758 = vpop.permute.xlu0 %757
      %759 = vrot.lane.b32.xlu0 %v682, 12
      %v760 = vpop.permute.xlu0 %759
      %761 = vrot.lane.b32.xlu0 %v683, 12
      %v762 = vpop.permute.xlu0 %761
      %763 = vrot.lane.b32.xlu0 %v684, 12
      %v764 = vpop.permute.xlu0 %763
      %765 = vrot.lane.b32.xlu0 %v685, 12
      %v766 = vpop.permute.xlu0 %765
      %767 = vrot.lane.b32.xlu0 %v686, 12
      %v768 = vpop.permute.xlu0 %767
      %769 = vrot.lane.b32.xlu0 %v687, 12
      %v770 = vpop.permute.xlu0 %769
      %771 = vrot.lane.b32.xlu0 %v688, 12
      %v772 = vpop.permute.xlu0 %771
      %773 = vrot.lane.b32.xlu0 %v689, 12
      %v774 = vpop.permute.xlu0 %773
      %775 = vrot.lane.b32.xlu0 %v690, 12
      %v776 = vpop.permute.xlu0 %775
      %777 = vrot.lane.b32.xlu0 %v691, 12
      %v778 = vpop.permute.xlu0 %777
      %779 = vrot.lane.b32.xlu0 %v692, 12
      %v780 = vpop.permute.xlu0 %779
      %781 = vrot.lane.b32.xlu0 %v693, 12
      %v782 = vpop.permute.xlu0 %781
      %783 = vrot.lane.b32.xlu0 %v694, 12
      %v784 = vpop.permute.xlu0 %783
      %785 = vrot.lane.b32.xlu0 %v695, 12
      %v786 = vpop.permute.xlu0 %785
      %787 = vrot.lane.b32.xlu0 %v696, 12
      %v788 = vpop.permute.xlu0 %787
      %789 = vrot.lane.b32.xlu0 %v697, 12
      %v790 = vpop.permute.xlu0 %789
      %791 = vrot.lane.b32.xlu0 %v698, 12
      %v792 = vpop.permute.xlu0 %791
      %793 = vrot.lane.b32.xlu0 %v699, 12
      %v794 = vpop.permute.xlu0 %793
      %795 = vrot.lane.b32.xlu0 %v700, 12
      %v796 = vpop.permute.xlu0 %795
      %vm829 = vcmask 130144
      %830 = vst.msk [vmem:[#allocation2 + $0x1] sm:$0xff] %vm829, %v734
      %vm831 = vcmask 129120
      %832 = vst.msk [vmem:[#allocation2 + $0x9] sm:$0x7f] %vm831, %v736
      %833 = vst.msk [vmem:[#allocation2 + $0x11] sm:$0xff] %vm829, %v738
      %834 = vst.msk [vmem:[#allocation2 + $0x19] sm:$0x7f] %vm831, %v740
      %835 = vst.msk [vmem:[#allocation2 + $0x21] sm:$0xff] %vm829, %v742
      %836 = vst.msk [vmem:[#allocation2 + $0x29] sm:$0x7f] %vm831, %v744
      %837 = vst.msk [vmem:[#allocation2 + $0x31] sm:$0xff] %vm829, %v746
      %838 = vst.msk [vmem:[#allocation2 + $0x39] sm:$0x7f] %vm831, %v748
      %839 = vst.msk [vmem:[#allocation2 + $0x41] sm:$0xff] %vm829, %v750
      %840 = vst.msk [vmem:[#allocation2 + $0x49] sm:$0x7f] %vm831, %v752
      %841 = vst.msk [vmem:[#allocation2 + $0x51] sm:$0xff] %vm829, %v754
      %842 = vst.msk [vmem:[#allocation2 + $0x59] sm:$0x7f] %vm831, %v756
      %843 = vst.msk [vmem:[#allocation2 + $0x61] sm:$0xff] %vm829, %v758
      %844 = vst.msk [vmem:[#allocation2 + $0x69] sm:$0x7f] %vm831, %v760
      %845 = vst.msk [vmem:[#allocation2 + $0x71] sm:$0xff] %vm829, %v762
      %846 = vst.msk [vmem:[#allocation2 + $0x79] sm:$0x7f] %vm831, %v764
      %847 = vst.msk [vmem:[#allocation2 + $0x81] sm:$0xff] %vm829, %v766
      %848 = vst.msk [vmem:[#allocation2 + $0x89] sm:$0x7f] %vm831, %v768
      %849 = vst.msk [vmem:[#allocation2 + $0x91] sm:$0xff] %vm829, %v770
      %850 = vst.msk [vmem:[#allocation2 + $0x99] sm:$0x7f] %vm831, %v772
      %851 = vst.msk [vmem:[#allocation2 + $0xa1] sm:$0xff] %vm829, %v774
      %852 = vst.msk [vmem:[#allocation2 + $0xa9] sm:$0x7f] %vm831, %v776
      %853 = vst.msk [vmem:[#allocation2 + $0xb1] sm:$0xff] %vm829, %v778
      %854 = vst.msk [vmem:[#allocation2 + $0xb9] sm:$0x7f] %vm831, %v780
      %855 = vst.msk [vmem:[#allocation2 + $0xc1] sm:$0xff] %vm829, %v782
      %856 = vst.msk [vmem:[#allocation2 + $0xc9] sm:$0x7f] %vm831, %v784
      %857 = vst.msk [vmem:[#allocation2 + $0xd1] sm:$0xff] %vm829, %v786
      %858 = vst.msk [vmem:[#allocation2 + $0xd9] sm:$0x7f] %vm831, %v788
      %859 = vst.msk [vmem:[#allocation2 + $0xe1] sm:$0xff] %vm829, %v790
      %860 = vst.msk [vmem:[#allocation2 + $0xe9] sm:$0x7f] %vm831, %v792
      %861 = vst.msk [vmem:[#allocation2 + $0xf1] sm:$0xff] %vm829, %v794
      %862 = vst.msk [vmem:[#allocation2 + $0xf9] sm:$0x7f] %vm831, %v796
      %v863 = vld [vmem:[%s199] sm:$0xff]
      %v864 = vld [vmem:[%s199 + $0x8] sm:$0xff]
      %v865 = vld [vmem:[%s199 + $0x10] sm:$0xff]
      %v866 = vld [vmem:[%s199 + $0x18] sm:$0xff]
      %v867 = vld [vmem:[%s199 + $0x20] sm:$0xff]
      %v868 = vld [vmem:[%s199 + $0x28] sm:$0xff]
      %v869 = vld [vmem:[%s199 + $0x30] sm:$0xff]
      %v870 = vld [vmem:[%s199 + $0x38] sm:$0xff]
      %v871 = vld [vmem:[%s199 + $0x40] sm:$0xff]
      %v872 = vld [vmem:[%s199 + $0x48] sm:$0xff]
      %v873 = vld [vmem:[%s199 + $0x50] sm:$0xff]
      %v874 = vld [vmem:[%s199 + $0x58] sm:$0xff]
      %v875 = vld [vmem:[%s199 + $0x60] sm:$0xff]
      %v876 = vld [vmem:[%s199 + $0x68] sm:$0xff]
      %v877 = vld [vmem:[%s199 + $0x70] sm:$0xff]
      %v878 = vld [vmem:[%s199 + $0x78] sm:$0xff]
      %v879 = vld [vmem:[%s199 + $0x80] sm:$0xff]
      %v880 = vld [vmem:[%s199 + $0x88] sm:$0xff]
      %v881 = vld [vmem:[%s199 + $0x90] sm:$0xff]
      %v882 = vld [vmem:[%s199 + $0x98] sm:$0xff]
      %v883 = vld [vmem:[%s199 + $0xa0] sm:$0xff]
      %v884 = vld [vmem:[%s199 + $0xa8] sm:$0xff]
      %v885 = vld [vmem:[%s199 + $0xb0] sm:$0xff]
      %v886 = vld [vmem:[%s199 + $0xb8] sm:$0xff]
      %v887 = vld [vmem:[%s199 + $0xc0] sm:$0xff]
      %v888 = vld [vmem:[%s199 + $0xc8] sm:$0xff]
      %v889 = vld [vmem:[%s199 + $0xd0] sm:$0xff]
      %v890 = vld [vmem:[%s199 + $0xd8] sm:$0xff]
      %v891 = vld [vmem:[%s199 + $0xe0] sm:$0xff]
      %v892 = vld [vmem:[%s199 + $0xe8] sm:$0xff]
      %v893 = vld [vmem:[%s199 + $0xf0] sm:$0xff]
      %v894 = vld [vmem:[%s199 + $0xf8] sm:$0xff]
      %927 = vrot.lane.b32.xlu0 %v863, 16
      %v928 = vpop.permute.xlu0 %927
      %929 = vrot.lane.b32.xlu0 %v864, 16
      %v930 = vpop.permute.xlu0 %929
      %931 = vrot.lane.b32.xlu0 %v865, 16
      %v932 = vpop.permute.xlu0 %931
      %933 = vrot.lane.b32.xlu0 %v866, 16
      %v934 = vpop.permute.xlu0 %933
      %935 = vrot.lane.b32.xlu0 %v867, 16
      %v936 = vpop.permute.xlu0 %935
      %937 = vrot.lane.b32.xlu0 %v868, 16
      %v938 = vpop.permute.xlu0 %937
      %939 = vrot.lane.b32.xlu0 %v869, 16
      %v940 = vpop.permute.xlu0 %939
      %941 = vrot.lane.b32.xlu0 %v870, 16
      %v942 = vpop.permute.xlu0 %941
      %943 = vrot.lane.b32.xlu0 %v871, 16
      %v944 = vpop.permute.xlu0 %943
      %945 = vrot.lane.b32.xlu0 %v872, 16
      %v946 = vpop.permute.xlu0 %945
      %947 = vrot.lane.b32.xlu0 %v873, 16
      %v948 = vpop.permute.xlu0 %947
      %949 = vrot.lane.b32.xlu0 %v874, 16
      %v950 = vpop.permute.xlu0 %949
      %951 = vrot.lane.b32.xlu0 %v875, 16
      %v952 = vpop.permute.xlu0 %951
      %953 = vrot.lane.b32.xlu0 %v876, 16
      %v954 = vpop.permute.xlu0 %953
      %955 = vrot.lane.b32.xlu0 %v877, 16
      %v956 = vpop.permute.xlu0 %955
      %957 = vrot.lane.b32.xlu0 %v878, 16
      %v958 = vpop.permute.xlu0 %957
      %959 = vrot.lane.b32.xlu0 %v879, 16
      %v960 = vpop.permute.xlu0 %959
      %961 = vrot.lane.b32.xlu0 %v880, 16
      %v962 = vpop.permute.xlu0 %961
      %963 = vrot.lane.b32.xlu0 %v881, 16
      %v964 = vpop.permute.xlu0 %963
      %965 = vrot.lane.b32.xlu0 %v882, 16
      %v966 = vpop.permute.xlu0 %965
      %967 = vrot.lane.b32.xlu0 %v883, 16
      %v968 = vpop.permute.xlu0 %967
      %969 = vrot.lane.b32.xlu0 %v884, 16
      %v970 = vpop.permute.xlu0 %969
      %971 = vrot.lane.b32.xlu0 %v885, 16
      %v972 = vpop.permute.xlu0 %971
      %973 = vrot.lane.b32.xlu0 %v886, 16
      %v974 = vpop.permute.xlu0 %973
      %975 = vrot.lane.b32.xlu0 %v887, 16
      %v976 = vpop.permute.xlu0 %975
      %977 = vrot.lane.b32.xlu0 %v888, 16
      %v978 = vpop.permute.xlu0 %977
      %979 = vrot.lane.b32.xlu0 %v889, 16
      %v980 = vpop.permute.xlu0 %979
      %981 = vrot.lane.b32.xlu0 %v890, 16
      %v982 = vpop.permute.xlu0 %981
      %983 = vrot.lane.b32.xlu0 %v891, 16
      %v984 = vpop.permute.xlu0 %983
      %985 = vrot.lane.b32.xlu0 %v892, 16
      %v986 = vpop.permute.xlu0 %985
      %987 = vrot.lane.b32.xlu0 %v893, 16
      %v988 = vpop.permute.xlu0 %987
      %989 = vrot.lane.b32.xlu0 %v894, 16
      %v990 = vpop.permute.xlu0 %989
      %vm1023 = vcmask 162944
      %1024 = vst.msk [vmem:[#allocation2] sm:$0xff] %vm1023, %v928
      %1025 = vst.msk [vmem:[#allocation2 + $0x8] sm:$0xff] %vm1023, %v930
      %1026 = vst.msk [vmem:[#allocation2 + $0x10] sm:$0xff] %vm1023, %v932
      %1027 = vst.msk [vmem:[#allocation2 + $0x18] sm:$0xff] %vm1023, %v934
      %1028 = vst.msk [vmem:[#allocation2 + $0x20] sm:$0xff] %vm1023, %v936
      %1029 = vst.msk [vmem:[#allocation2 + $0x28] sm:$0xff] %vm1023, %v938
      %1030 = vst.msk [vmem:[#allocation2 + $0x30] sm:$0xff] %vm1023, %v940
      %1031 = vst.msk [vmem:[#allocation2 + $0x38] sm:$0xff] %vm1023, %v942
      %1032 = vst.msk [vmem:[#allocation2 + $0x40] sm:$0xff] %vm1023, %v944
      %1033 = vst.msk [vmem:[#allocation2 + $0x48] sm:$0xff] %vm1023, %v946
      %1034 = vst.msk [vmem:[#allocation2 + $0x50] sm:$0xff] %vm1023, %v948
      %1035 = vst.msk [vmem:[#allocation2 + $0x58] sm:$0xff] %vm1023, %v950
      %1036 = vst.msk [vmem:[#allocation2 + $0x60] sm:$0xff] %vm1023, %v952
      %1037 = vst.msk [vmem:[#allocation2 + $0x68] sm:$0xff] %vm1023, %v954
      %1038 = vst.msk [vmem:[#allocation2 + $0x70] sm:$0xff] %vm1023, %v956
      %1039 = vst.msk [vmem:[#allocation2 + $0x78] sm:$0xff] %vm1023, %v958
      %1040 = vst.msk [vmem:[#allocation2 + $0x80] sm:$0xff] %vm1023, %v960
      %1041 = vst.msk [vmem:[#allocation2 + $0x88] sm:$0xff] %vm1023, %v962
      %1042 = vst.msk [vmem:[#allocation2 + $0x90] sm:$0xff] %vm1023, %v964
      %1043 = vst.msk [vmem:[#allocation2 + $0x98] sm:$0xff] %vm1023, %v966
      %1044 = vst.msk [vmem:[#allocation2 + $0xa0] sm:$0xff] %vm1023, %v968
      %1045 = vst.msk [vmem:[#allocation2 + $0xa8] sm:$0xff] %vm1023, %v970
      %1046 = vst.msk [vmem:[#allocation2 + $0xb0] sm:$0xff] %vm1023, %v972
      %1047 = vst.msk [vmem:[#allocation2 + $0xb8] sm:$0xff] %vm1023, %v974
      %1048 = vst.msk [vmem:[#allocation2 + $0xc0] sm:$0xff] %vm1023, %v976
      %1049 = vst.msk [vmem:[#allocation2 + $0xc8] sm:$0xff] %vm1023, %v978
      %1050 = vst.msk [vmem:[#allocation2 + $0xd0] sm:$0xff] %vm1023, %v980
      %1051 = vst.msk [vmem:[#allocation2 + $0xd8] sm:$0xff] %vm1023, %v982
      %1052 = vst.msk [vmem:[#allocation2 + $0xe0] sm:$0xff] %vm1023, %v984
      %1053 = vst.msk [vmem:[#allocation2 + $0xe8] sm:$0xff] %vm1023, %v986
      %1054 = vst.msk [vmem:[#allocation2 + $0xf0] sm:$0xff] %vm1023, %v988
      %1055 = vst.msk [vmem:[#allocation2 + $0xf8] sm:$0xff] %vm1023, %v990
      %v1056 = vld [vmem:[%s199 + $0x1] sm:$0xff]
      %v1057 = vld [vmem:[%s199 + $0x9] sm:$0x7f]
      %v1058 = vld [vmem:[%s199 + $0x11] sm:$0xff]
      %v1059 = vld [vmem:[%s199 + $0x19] sm:$0x7f]
      %v1060 = vld [vmem:[%s199 + $0x21] sm:$0xff]
      %v1061 = vld [vmem:[%s199 + $0x29] sm:$0x7f]
      %v1062 = vld [vmem:[%s199 + $0x31] sm:$0xff]
      %v1063 = vld [vmem:[%s199 + $0x39] sm:$0x7f]
      %v1064 = vld [vmem:[%s199 + $0x41] sm:$0xff]
      %v1065 = vld [vmem:[%s199 + $0x49] sm:$0x7f]
      %v1066 = vld [vmem:[%s199 + $0x51] sm:$0xff]
      %v1067 = vld [vmem:[%s199 + $0x59] sm:$0x7f]
      %v1068 = vld [vmem:[%s199 + $0x61] sm:$0xff]
      %v1069 = vld [vmem:[%s199 + $0x69] sm:$0x7f]
      %v1070 = vld [vmem:[%s199 + $0x71] sm:$0xff]
      %v1071 = vld [vmem:[%s199 + $0x79] sm:$0x7f]
      %v1072 = vld [vmem:[%s199 + $0x81] sm:$0xff]
      %v1073 = vld [vmem:[%s199 + $0x89] sm:$0x7f]
      %v1074 = vld [vmem:[%s199 + $0x91] sm:$0xff]
      %v1075 = vld [vmem:[%s199 + $0x99] sm:$0x7f]
      %v1076 = vld [vmem:[%s199 + $0xa1] sm:$0xff]
      %v1077 = vld [vmem:[%s199 + $0xa9] sm:$0x7f]
      %v1078 = vld [vmem:[%s199 + $0xb1] sm:$0xff]
      %v1079 = vld [vmem:[%s199 + $0xb9] sm:$0x7f]
      %v1080 = vld [vmem:[%s199 + $0xc1] sm:$0xff]
      %v1081 = vld [vmem:[%s199 + $0xc9] sm:$0x7f]
      %v1082 = vld [vmem:[%s199 + $0xd1] sm:$0xff]
      %v1083 = vld [vmem:[%s199 + $0xd9] sm:$0x7f]
      %v1084 = vld [vmem:[%s199 + $0xe1] sm:$0xff]
      %v1085 = vld [vmem:[%s199 + $0xe9] sm:$0x7f]
      %v1086 = vld [vmem:[%s199 + $0xf1] sm:$0xff]
      %v1087 = vld [vmem:[%s199 + $0xf9] sm:$0x7f]
      %1120 = vrot.lane.b32.xlu0 %v1056, 20
      %v1121 = vpop.permute.xlu0 %1120
      %1122 = vrot.lane.b32.xlu0 %v1057, 20
      %v1123 = vpop.permute.xlu0 %1122
      %1124 = vrot.lane.b32.xlu0 %v1058, 20
      %v1125 = vpop.permute.xlu0 %1124
      %1126 = vrot.lane.b32.xlu0 %v1059, 20
      %v1127 = vpop.permute.xlu0 %1126
      %1128 = vrot.lane.b32.xlu0 %v1060, 20
      %v1129 = vpop.permute.xlu0 %1128
      %1130 = vrot.lane.b32.xlu0 %v1061, 20
      %v1131 = vpop.permute.xlu0 %1130
      %1132 = vrot.lane.b32.xlu0 %v1062, 20
      %v1133 = vpop.permute.xlu0 %1132
      %1134 = vrot.lane.b32.xlu0 %v1063, 20
      %v1135 = vpop.permute.xlu0 %1134
      %1136 = vrot.lane.b32.xlu0 %v1064, 20
      %v1137 = vpop.permute.xlu0 %1136
      %1138 = vrot.lane.b32.xlu0 %v1065, 20
      %v1139 = vpop.permute.xlu0 %1138
      %1140 = vrot.lane.b32.xlu0 %v1066, 20
      %v1141 = vpop.permute.xlu0 %1140
      %1142 = vrot.lane.b32.xlu0 %v1067, 20
      %v1143 = vpop.permute.xlu0 %1142
      %1144 = vrot.lane.b32.xlu0 %v1068, 20
      %v1145 = vpop.permute.xlu0 %1144
      %1146 = vrot.lane.b32.xlu0 %v1069, 20
      %v1147 = vpop.permute.xlu0 %1146
      %1148 = vrot.lane.b32.xlu0 %v1070, 20
      %v1149 = vpop.permute.xlu0 %1148
      %1150 = vrot.lane.b32.xlu0 %v1071, 20
      %v1151 = vpop.permute.xlu0 %1150
      %1152 = vrot.lane.b32.xlu0 %v1072, 20
      %v1153 = vpop.permute.xlu0 %1152
      %1154 = vrot.lane.b32.xlu0 %v1073, 20
      %v1155 = vpop.permute.xlu0 %1154
      %1156 = vrot.lane.b32.xlu0 %v1074, 20
      %v1157 = vpop.permute.xlu0 %1156
      %1158 = vrot.lane.b32.xlu0 %v1075, 20
      %v1159 = vpop.permute.xlu0 %1158
      %1160 = vrot.lane.b32.xlu0 %v1076, 20
      %v1161 = vpop.permute.xlu0 %1160
      %1162 = vrot.lane.b32.xlu0 %v1077, 20
      %v1163 = vpop.permute.xlu0 %1162
      %1164 = vrot.lane.b32.xlu0 %v1078, 20
      %v1165 = vpop.permute.xlu0 %1164
      %1166 = vrot.lane.b32.xlu0 %v1079, 20
      %v1167 = vpop.permute.xlu0 %1166
      %1168 = vrot.lane.b32.xlu0 %v1080, 20
      %v1169 = vpop.permute.xlu0 %1168
      %1170 = vrot.lane.b32.xlu0 %v1081, 20
      %v1171 = vpop.permute.xlu0 %1170
      %1172 = vrot.lane.b32.xlu0 %v1082, 20
      %v1173 = vpop.permute.xlu0 %1172
      %1174 = vrot.lane.b32.xlu0 %v1083, 20
      %v1175 = vpop.permute.xlu0 %1174
      %1176 = vrot.lane.b32.xlu0 %v1084, 20
      %v1177 = vpop.permute.xlu0 %1176
      %1178 = vrot.lane.b32.xlu0 %v1085, 20
      %v1179 = vpop.permute.xlu0 %1178
      %1180 = vrot.lane.b32.xlu0 %v1086, 20
      %v1181 = vpop.permute.xlu0 %1180
      %1182 = vrot.lane.b32.xlu0 %v1087, 20
      %v1183 = vpop.permute.xlu0 %1182
      %vm1216 = vcmask 195744
      %1217 = vst.msk [vmem:[#allocation2] sm:$0xff] %vm1216, %v1121
      %vm1218 = vcmask 194720
      %1219 = vst.msk [vmem:[#allocation2 + $0x8] sm:$0x7f] %vm1218, %v1123
      %1220 = vst.msk [vmem:[#allocation2 + $0x10] sm:$0xff] %vm1216, %v1125
      %1221 = vst.msk [vmem:[#allocation2 + $0x18] sm:$0x7f] %vm1218, %v1127
      %1222 = vst.msk [vmem:[#allocation2 + $0x20] sm:$0xff] %vm1216, %v1129
      %1223 = vst.msk [vmem:[#allocation2 + $0x28] sm:$0x7f] %vm1218, %v1131
      %1224 = vst.msk [vmem:[#allocation2 + $0x30] sm:$0xff] %vm1216, %v1133
      %1225 = vst.msk [vmem:[#allocation2 + $0x38] sm:$0x7f] %vm1218, %v1135
      %1226 = vst.msk [vmem:[#allocation2 + $0x40] sm:$0xff] %vm1216, %v1137
      %1227 = vst.msk [vmem:[#allocation2 + $0x48] sm:$0x7f] %vm1218, %v1139
      %1228 = vst.msk [vmem:[#allocation2 + $0x50] sm:$0xff] %vm1216, %v1141
      %1229 = vst.msk [vmem:[#allocation2 + $0x58] sm:$0x7f] %vm1218, %v1143
      %1230 = vst.msk [vmem:[#allocation2 + $0x60] sm:$0xff] %vm1216, %v1145
      %1231 = vst.msk [vmem:[#allocation2 + $0x68] sm:$0x7f] %vm1218, %v1147
      %1232 = vst.msk [vmem:[#allocation2 + $0x70] sm:$0xff] %vm1216, %v1149
      %1233 = vst.msk [vmem:[#allocation2 + $0x78] sm:$0x7f] %vm1218, %v1151
      %1234 = vst.msk [vmem:[#allocation2 + $0x80] sm:$0xff] %vm1216, %v1153
      %1235 = vst.msk [vmem:[#allocation2 + $0x88] sm:$0x7f] %vm1218, %v1155
      %1236 = vst.msk [vmem:[#allocation2 + $0x90] sm:$0xff] %vm1216, %v1157
      %1237 = vst.msk [vmem:[#allocation2 + $0x98] sm:$0x7f] %vm1218, %v1159
      %1238 = vst.msk [vmem:[#allocation2 + $0xa0] sm:$0xff] %vm1216, %v1161
      %1239 = vst.msk [vmem:[#allocation2 + $0xa8] sm:$0x7f] %vm1218, %v1163
      %1240 = vst.msk [vmem:[#allocation2 + $0xb0] sm:$0xff] %vm1216, %v1165
      %1241 = vst.msk [vmem:[#allocation2 + $0xb8] sm:$0x7f] %vm1218, %v1167
      %1242 = vst.msk [vmem:[#allocation2 + $0xc0] sm:$0xff] %vm1216, %v1169
      %1243 = vst.msk [vmem:[#allocation2 + $0xc8] sm:$0x7f] %vm1218, %v1171
      %1244 = vst.msk [vmem:[#allocation2 + $0xd0] sm:$0xff] %vm1216, %v1173
      %1245 = vst.msk [vmem:[#allocation2 + $0xd8] sm:$0x7f] %vm1218, %v1175
      %1246 = vst.msk [vmem:[#allocation2 + $0xe0] sm:$0xff] %vm1216, %v1177
      %1247 = vst.msk [vmem:[#allocation2 + $0xe8] sm:$0x7f] %vm1218, %v1179
      %1248 = vst.msk [vmem:[#allocation2 + $0xf0] sm:$0xff] %vm1216, %v1181
      %1249 = vst.msk [vmem:[#allocation2 + $0xf8] sm:$0x7f] %vm1218, %v1183
      %s1250 = scalar_lea.vmem %s199, 16
      %v1251 = vld [vmem:[%s1250] sm:$0xff]
      %v1252 = vld [vmem:[%s1250 + $0x8] sm:$0x7f]
      %v1253 = vld [vmem:[%s1250 + $0x10] sm:$0xff]
      %v1254 = vld [vmem:[%s1250 + $0x18] sm:$0x7f]
      %v1255 = vld [vmem:[%s1250 + $0x20] sm:$0xff]
      %v1256 = vld [vmem:[%s1250 + $0x28] sm:$0x7f]
      %v1257 = vld [vmem:[%s1250 + $0x30] sm:$0xff]
      %v1258 = vld [vmem:[%s1250 + $0x38] sm:$0x7f]
      %v1259 = vld [vmem:[%s1250 + $0x40] sm:$0xff]
      %v1260 = vld [vmem:[%s1250 + $0x48] sm:$0x7f]
      %v1261 = vld [vmem:[%s1250 + $0x50] sm:$0xff]
      %v1262 = vld [vmem:[%s1250 + $0x58] sm:$0x7f]
      %v1263 = vld [vmem:[%s1250 + $0x60] sm:$0xff]
      %v1264 = vld [vmem:[%s1250 + $0x68] sm:$0x7f]
      %v1265 = vld [vmem:[%s1250 + $0x70] sm:$0xff]
      %v1266 = vld [vmem:[%s1250 + $0x78] sm:$0x7f]
      %v1267 = vld [vmem:[%s1250 + $0x80] sm:$0xff]
      %v1268 = vld [vmem:[%s1250 + $0x88] sm:$0x7f]
      %v1269 = vld [vmem:[%s1250 + $0x90] sm:$0xff]
      %v1270 = vld [vmem:[%s1250 + $0x98] sm:$0x7f]
      %v1271 = vld [vmem:[%s1250 + $0xa0] sm:$0xff]
      %v1272 = vld [vmem:[%s1250 + $0xa8] sm:$0x7f]
      %v1273 = vld [vmem:[%s1250 + $0xb0] sm:$0xff]
      %v1274 = vld [vmem:[%s1250 + $0xb8] sm:$0x7f]
      %v1275 = vld [vmem:[%s1250 + $0xc0] sm:$0xff]
      %v1276 = vld [vmem:[%s1250 + $0xc8] sm:$0x7f]
      %v1277 = vld [vmem:[%s1250 + $0xd0] sm:$0xff]
      %v1278 = vld [vmem:[%s1250 + $0xd8] sm:$0x7f]
      %v1279 = vld [vmem:[%s1250 + $0xe0] sm:$0xff]
      %v1280 = vld [vmem:[%s1250 + $0xe8] sm:$0x7f]
      %1311 = vrot.lane.b32.xlu0 %v1251, 24
      %v1312 = vpop.permute.xlu0 %1311
      %1313 = vrot.lane.b32.xlu0 %v1252, 24
      %v1314 = vpop.permute.xlu0 %1313
      %1315 = vrot.lane.b32.xlu0 %v1253, 24
      %v1316 = vpop.permute.xlu0 %1315
      %1317 = vrot.lane.b32.xlu0 %v1254, 24
      %v1318 = vpop.permute.xlu0 %1317
      %1319 = vrot.lane.b32.xlu0 %v1255, 24
      %v1320 = vpop.permute.xlu0 %1319
      %1321 = vrot.lane.b32.xlu0 %v1256, 24
      %v1322 = vpop.permute.xlu0 %1321
      %1323 = vrot.lane.b32.xlu0 %v1257, 24
      %v1324 = vpop.permute.xlu0 %1323
      %1325 = vrot.lane.b32.xlu0 %v1258, 24
      %v1326 = vpop.permute.xlu0 %1325
      %1327 = vrot.lane.b32.xlu0 %v1259, 24
      %v1328 = vpop.permute.xlu0 %1327
      %1329 = vrot.lane.b32.xlu0 %v1260, 24
      %v1330 = vpop.permute.xlu0 %1329
      %1331 = vrot.lane.b32.xlu0 %v1261, 24
      %v1332 = vpop.permute.xlu0 %1331
      %1333 = vrot.lane.b32.xlu0 %v1262, 24
      %v1334 = vpop.permute.xlu0 %1333
      %1335 = vrot.lane.b32.xlu0 %v1263, 24
      %v1336 = vpop.permute.xlu0 %1335
      %1337 = vrot.lane.b32.xlu0 %v1264, 24
      %v1338 = vpop.permute.xlu0 %1337
      %1339 = vrot.lane.b32.xlu0 %v1265, 24
      %v1340 = vpop.permute.xlu0 %1339
      %1341 = vrot.lane.b32.xlu0 %v1266, 24
      %v1342 = vpop.permute.xlu0 %1341
      %1343 = vrot.lane.b32.xlu0 %v1267, 24
      %v1344 = vpop.permute.xlu0 %1343
      %1345 = vrot.lane.b32.xlu0 %v1268, 24
      %v1346 = vpop.permute.xlu0 %1345
      %1347 = vrot.lane.b32.xlu0 %v1269, 24
      %v1348 = vpop.permute.xlu0 %1347
      %1349 = vrot.lane.b32.xlu0 %v1270, 24
      %v1350 = vpop.permute.xlu0 %1349
      %1351 = vrot.lane.b32.xlu0 %v1271, 24
      %v1352 = vpop.permute.xlu0 %1351
      %1353 = vrot.lane.b32.xlu0 %v1272, 24
      %v1354 = vpop.permute.xlu0 %1353
      %1355 = vrot.lane.b32.xlu0 %v1273, 24
      %v1356 = vpop.permute.xlu0 %1355
      %1357 = vrot.lane.b32.xlu0 %v1274, 24
      %v1358 = vpop.permute.xlu0 %1357
      %1359 = vrot.lane.b32.xlu0 %v1275, 24
      %v1360 = vpop.permute.xlu0 %1359
      %1361 = vrot.lane.b32.xlu0 %v1276, 24
      %v1362 = vpop.permute.xlu0 %1361
      %1363 = vrot.lane.b32.xlu0 %v1277, 24
      %v1364 = vpop.permute.xlu0 %1363
      %1365 = vrot.lane.b32.xlu0 %v1278, 24
      %v1366 = vpop.permute.xlu0 %1365
      %1367 = vrot.lane.b32.xlu0 %v1279, 24
      %v1368 = vpop.permute.xlu0 %1367
      %1369 = vrot.lane.b32.xlu0 %v1280, 24
      %v1370 = vpop.permute.xlu0 %1369
      %vm1401 = vcmask 228544
      %1402 = vst.msk [vmem:[#allocation2 + $0x1] sm:$0xff] %vm1401, %v1312
      %vm1403 = vcmask 227520
      %1404 = vst.msk [vmem:[#allocation2 + $0x9] sm:$0x7f] %vm1403, %v1314
      %1405 = vst.msk [vmem:[#allocation2 + $0x11] sm:$0xff] %vm1401, %v1316
      %1406 = vst.msk [vmem:[#allocation2 + $0x19] sm:$0x7f] %vm1403, %v1318
      %1407 = vst.msk [vmem:[#allocation2 + $0x21] sm:$0xff] %vm1401, %v1320
      %1408 = vst.msk [vmem:[#allocation2 + $0x29] sm:$0x7f] %vm1403, %v1322
      %1409 = vst.msk [vmem:[#allocation2 + $0x31] sm:$0xff] %vm1401, %v1324
      %1410 = vst.msk [vmem:[#allocation2 + $0x39] sm:$0x7f] %vm1403, %v1326
      %1411 = vst.msk [vmem:[#allocation2 + $0x41] sm:$0xff] %vm1401, %v1328
      %1412 = vst.msk [vmem:[#allocation2 + $0x49] sm:$0x7f] %vm1403, %v1330
      %1413 = vst.msk [vmem:[#allocation2 + $0x51] sm:$0xff] %vm1401, %v1332
      %1414 = vst.msk [vmem:[#allocation2 + $0x59] sm:$0x7f] %vm1403, %v1334
      %1415 = vst.msk [vmem:[#allocation2 + $0x61] sm:$0xff] %vm1401, %v1336
      %1416 = vst.msk [vmem:[#allocation2 + $0x69] sm:$0x7f] %vm1403, %v1338
      %1417 = vst.msk [vmem:[#allocation2 + $0x71] sm:$0xff] %vm1401, %v1340
      %1418 = vst.msk [vmem:[#allocation2 + $0x79] sm:$0x7f] %vm1403, %v1342
      %1419 = vst.msk [vmem:[#allocation2 + $0x81] sm:$0xff] %vm1401, %v1344
      %1420 = vst.msk [vmem:[#allocation2 + $0x89] sm:$0x7f] %vm1403, %v1346
      %1421 = vst.msk [vmem:[#allocation2 + $0x91] sm:$0xff] %vm1401, %v1348
      %1422 = vst.msk [vmem:[#allocation2 + $0x99] sm:$0x7f] %vm1403, %v1350
      %1423 = vst.msk [vmem:[#allocation2 + $0xa1] sm:$0xff] %vm1401, %v1352
      %1424 = vst.msk [vmem:[#allocation2 + $0xa9] sm:$0x7f] %vm1403, %v1354
      %1425 = vst.msk [vmem:[#allocation2 + $0xb1] sm:$0xff] %vm1401, %v1356
      %1426 = vst.msk [vmem:[#allocation2 + $0xb9] sm:$0x7f] %vm1403, %v1358
      %1427 = vst.msk [vmem:[#allocation2 + $0xc1] sm:$0xff] %vm1401, %v1360
      %1428 = vst.msk [vmem:[#allocation2 + $0xc9] sm:$0x7f] %vm1403, %v1362
      %1429 = vst.msk [vmem:[#allocation2 + $0xd1] sm:$0xff] %vm1401, %v1364
      %1430 = vst.msk [vmem:[#allocation2 + $0xd9] sm:$0x7f] %vm1403, %v1366
      %1431 = vst.msk [vmem:[#allocation2 + $0xe1] sm:$0xff] %vm1401, %v1368
      %1432 = vst.msk [vmem:[#allocation2 + $0xe9] sm:$0x7f] %vm1403, %v1370
      %v1433 = vld [vmem:[%s1250] sm:$0xff]
      %v1434 = vld [vmem:[%s1250 + $0x8] sm:$0xff]
      %v1435 = vld [vmem:[%s1250 + $0x10] sm:$0xff]
      %v1436 = vld [vmem:[%s1250 + $0x18] sm:$0xff]
      %v1437 = vld [vmem:[%s1250 + $0x20] sm:$0xff]
      %v1438 = vld [vmem:[%s1250 + $0x28] sm:$0xff]
      %v1439 = vld [vmem:[%s1250 + $0x30] sm:$0xff]
      %v1440 = vld [vmem:[%s1250 + $0x38] sm:$0xff]
      %v1441 = vld [vmem:[%s1250 + $0x40] sm:$0xff]
      %v1442 = vld [vmem:[%s1250 + $0x48] sm:$0xff]
      %v1443 = vld [vmem:[%s1250 + $0x50] sm:$0xff]
      %v1444 = vld [vmem:[%s1250 + $0x58] sm:$0xff]
      %v1445 = vld [vmem:[%s1250 + $0x60] sm:$0xff]
      %v1446 = vld [vmem:[%s1250 + $0x68] sm:$0xff]
      %v1447 = vld [vmem:[%s1250 + $0x70] sm:$0xff]
      %v1448 = vld [vmem:[%s1250 + $0x78] sm:$0xff]
      %v1449 = vld [vmem:[%s1250 + $0x80] sm:$0xff]
      %v1450 = vld [vmem:[%s1250 + $0x88] sm:$0xff]
      %v1451 = vld [vmem:[%s1250 + $0x90] sm:$0xff]
      %v1452 = vld [vmem:[%s1250 + $0x98] sm:$0xff]
      %v1453 = vld [vmem:[%s1250 + $0xa0] sm:$0xff]
      %v1454 = vld [vmem:[%s1250 + $0xa8] sm:$0xff]
      %v1455 = vld [vmem:[%s1250 + $0xb0] sm:$0xff]
      %v1456 = vld [vmem:[%s1250 + $0xb8] sm:$0xff]
      %v1457 = vld [vmem:[%s1250 + $0xc0] sm:$0xff]
      %v1458 = vld [vmem:[%s1250 + $0xc8] sm:$0xff]
      %v1459 = vld [vmem:[%s1250 + $0xd0] sm:$0xff]
      %v1460 = vld [vmem:[%s1250 + $0xd8] sm:$0xff]
      %v1461 = vld [vmem:[%s1250 + $0xe0] sm:$0xff]
      %v1462 = vld [vmem:[%s1250 + $0xe8] sm:$0xff]
      %1493 = vrot.lane.b32.xlu0 %v1433, 28
      %v1494 = vpop.permute.xlu0 %1493
      %1495 = vrot.lane.b32.xlu0 %v1434, 28
      %v1496 = vpop.permute.xlu0 %1495
      %1497 = vrot.lane.b32.xlu0 %v1435, 28
      %v1498 = vpop.permute.xlu0 %1497
      %1499 = vrot.lane.b32.xlu0 %v1436, 28
      %v1500 = vpop.permute.xlu0 %1499
      %1501 = vrot.lane.b32.xlu0 %v1437, 28
      %v1502 = vpop.permute.xlu0 %1501
      %1503 = vrot.lane.b32.xlu0 %v1438, 28
      %v1504 = vpop.permute.xlu0 %1503
      %1505 = vrot.lane.b32.xlu0 %v1439, 28
      %v1506 = vpop.permute.xlu0 %1505
      %1507 = vrot.lane.b32.xlu0 %v1440, 28
      %v1508 = vpop.permute.xlu0 %1507
      %1509 = vrot.lane.b32.xlu0 %v1441, 28
      %v1510 = vpop.permute.xlu0 %1509
      %1511 = vrot.lane.b32.xlu0 %v1442, 28
      %v1512 = vpop.permute.xlu0 %1511
      %1513 = vrot.lane.b32.xlu0 %v1443, 28
      %v1514 = vpop.permute.xlu0 %1513
      %1515 = vrot.lane.b32.xlu0 %v1444, 28
      %v1516 = vpop.permute.xlu0 %1515
      %1517 = vrot.lane.b32.xlu0 %v1445, 28
      %v1518 = vpop.permute.xlu0 %1517
      %1519 = vrot.lane.b32.xlu0 %v1446, 28
      %v1520 = vpop.permute.xlu0 %1519
      %1521 = vrot.lane.b32.xlu0 %v1447, 28
      %v1522 = vpop.permute.xlu0 %1521
      %1523 = vrot.lane.b32.xlu0 %v1448, 28
      %v1524 = vpop.permute.xlu0 %1523
      %1525 = vrot.lane.b32.xlu0 %v1449, 28
      %v1526 = vpop.permute.xlu0 %1525
      %1527 = vrot.lane.b32.xlu0 %v1450, 28
      %v1528 = vpop.permute.xlu0 %1527
      %1529 = vrot.lane.b32.xlu0 %v1451, 28
      %v1530 = vpop.permute.xlu0 %1529
      %1531 = vrot.lane.b32.xlu0 %v1452, 28
      %v1532 = vpop.permute.xlu0 %1531
      %1533 = vrot.lane.b32.xlu0 %v1453, 28
      %v1534 = vpop.permute.xlu0 %1533
      %1535 = vrot.lane.b32.xlu0 %v1454, 28
      %v1536 = vpop.permute.xlu0 %1535
      %1537 = vrot.lane.b32.xlu0 %v1455, 28
      %v1538 = vpop.permute.xlu0 %1537
      %1539 = vrot.lane.b32.xlu0 %v1456, 28
      %v1540 = vpop.permute.xlu0 %1539
      %1541 = vrot.lane.b32.xlu0 %v1457, 28
      %v1542 = vpop.permute.xlu0 %1541
      %1543 = vrot.lane.b32.xlu0 %v1458, 28
      %v1544 = vpop.permute.xlu0 %1543
      %1545 = vrot.lane.b32.xlu0 %v1459, 28
      %v1546 = vpop.permute.xlu0 %1545
      %1547 = vrot.lane.b32.xlu0 %v1460, 28
      %v1548 = vpop.permute.xlu0 %1547
      %1549 = vrot.lane.b32.xlu0 %v1461, 28
      %v1550 = vpop.permute.xlu0 %1549
      %1551 = vrot.lane.b32.xlu0 %v1462, 28
      %v1552 = vpop.permute.xlu0 %1551
      %vm1583 = vcmask 261344
      %1584 = vst.msk [vmem:[#allocation2] sm:$0xff] %vm1583, %v1494
      %1585 = vst.msk [vmem:[#allocation2 + $0x8] sm:$0xff] %vm1583, %v1496
      %1586 = vst.msk [vmem:[#allocation2 + $0x10] sm:$0xff] %vm1583, %v1498
      %1587 = vst.msk [vmem:[#allocation2 + $0x18] sm:$0xff] %vm1583, %v1500
      %1588 = vst.msk [vmem:[#allocation2 + $0x20] sm:$0xff] %vm1583, %v1502
      %1589 = vst.msk [vmem:[#allocation2 + $0x28] sm:$0xff] %vm1583, %v1504
      %1590 = vst.msk [vmem:[#allocation2 + $0x30] sm:$0xff] %vm1583, %v1506
      %1591 = vst.msk [vmem:[#allocation2 + $0x38] sm:$0xff] %vm1583, %v1508
      %1592 = vst.msk [vmem:[#allocation2 + $0x40] sm:$0xff] %vm1583, %v1510
      %1593 = vst.msk [vmem:[#allocation2 + $0x48] sm:$0xff] %vm1583, %v1512
      %1594 = vst.msk [vmem:[#allocation2 + $0x50] sm:$0xff] %vm1583, %v1514
      %1595 = vst.msk [vmem:[#allocation2 + $0x58] sm:$0xff] %vm1583, %v1516
      %1596 = vst.msk [vmem:[#allocation2 + $0x60] sm:$0xff] %vm1583, %v1518
      %1597 = vst.msk [vmem:[#allocation2 + $0x68] sm:$0xff] %vm1583, %v1520
      %1598 = vst.msk [vmem:[#allocation2 + $0x70] sm:$0xff] %vm1583, %v1522
      %1599 = vst.msk [vmem:[#allocation2 + $0x78] sm:$0xff] %vm1583, %v1524
      %1600 = vst.msk [vmem:[#allocation2 + $0x80] sm:$0xff] %vm1583, %v1526
      %1601 = vst.msk [vmem:[#allocation2 + $0x88] sm:$0xff] %vm1583, %v1528
      %1602 = vst.msk [vmem:[#allocation2 + $0x90] sm:$0xff] %vm1583, %v1530
      %1603 = vst.msk [vmem:[#allocation2 + $0x98] sm:$0xff] %vm1583, %v1532
      %1604 = vst.msk [vmem:[#allocation2 + $0xa0] sm:$0xff] %vm1583, %v1534
      %1605 = vst.msk [vmem:[#allocation2 + $0xa8] sm:$0xff] %vm1583, %v1536
      %1606 = vst.msk [vmem:[#allocation2 + $0xb0] sm:$0xff] %vm1583, %v1538
      %1607 = vst.msk [vmem:[#allocation2 + $0xb8] sm:$0xff] %vm1583, %v1540
      %1608 = vst.msk [vmem:[#allocation2 + $0xc0] sm:$0xff] %vm1583, %v1542
      %1609 = vst.msk [vmem:[#allocation2 + $0xc8] sm:$0xff] %vm1583, %v1544
      %1610 = vst.msk [vmem:[#allocation2 + $0xd0] sm:$0xff] %vm1583, %v1546
      %1611 = vst.msk [vmem:[#allocation2 + $0xd8] sm:$0xff] %vm1583, %v1548
      %1612 = vst.msk [vmem:[#allocation2 + $0xe0] sm:$0xff] %vm1583, %v1550
      %1613 = vst.msk [vmem:[#allocation2 + $0xe8] sm:$0xff] %vm1583, %v1552
      %v1614 = vld [vmem:[%s1250 + $0x1] sm:$0xff]
      %v1615 = vld [vmem:[%s1250 + $0x9] sm:$0x7f]
      %v1616 = vld [vmem:[%s1250 + $0x11] sm:$0xff]
      %v1617 = vld [vmem:[%s1250 + $0x19] sm:$0x7f]
      %v1618 = vld [vmem:[%s1250 + $0x21] sm:$0xff]
      %v1619 = vld [vmem:[%s1250 + $0x29] sm:$0x7f]
      %v1620 = vld [vmem:[%s1250 + $0x31] sm:$0xff]
      %v1621 = vld [vmem:[%s1250 + $0x39] sm:$0x7f]
      %v1622 = vld [vmem:[%s1250 + $0x41] sm:$0xff]
      %v1623 = vld [vmem:[%s1250 + $0x49] sm:$0x7f]
      %v1624 = vld [vmem:[%s1250 + $0x51] sm:$0xff]
      %v1625 = vld [vmem:[%s1250 + $0x59] sm:$0x7f]
      %v1626 = vld [vmem:[%s1250 + $0x61] sm:$0xff]
      %v1627 = vld [vmem:[%s1250 + $0x69] sm:$0x7f]
      %v1628 = vld [vmem:[%s1250 + $0x71] sm:$0xff]
      %v1629 = vld [vmem:[%s1250 + $0x79] sm:$0x7f]
      %v1630 = vld [vmem:[%s1250 + $0x81] sm:$0xff]
      %v1631 = vld [vmem:[%s1250 + $0x89] sm:$0x7f]
      %v1632 = vld [vmem:[%s1250 + $0x91] sm:$0xff]
      %v1633 = vld [vmem:[%s1250 + $0x99] sm:$0x7f]
      %v1634 = vld [vmem:[%s1250 + $0xa1] sm:$0xff]
      %v1635 = vld [vmem:[%s1250 + $0xa9] sm:$0x7f]
      %v1636 = vld [vmem:[%s1250 + $0xb1] sm:$0xff]
      %v1637 = vld [vmem:[%s1250 + $0xb9] sm:$0x7f]
      %v1638 = vld [vmem:[%s1250 + $0xc1] sm:$0xff]
      %v1639 = vld [vmem:[%s1250 + $0xc9] sm:$0x7f]
      %v1640 = vld [vmem:[%s1250 + $0xd1] sm:$0xff]
      %v1641 = vld [vmem:[%s1250 + $0xd9] sm:$0x7f]
      %v1642 = vld [vmem:[%s1250 + $0xe1] sm:$0xff]
      %v1643 = vld [vmem:[%s1250 + $0xe9] sm:$0x7f]
      %1674 = vrot.lane.b32.xlu0 %v1614, 32
      %v1675 = vpop.permute.xlu0 %1674
      %1676 = vrot.lane.b32.xlu0 %v1615, 32
      %v1677 = vpop.permute.xlu0 %1676
      %1678 = vrot.lane.b32.xlu0 %v1616, 32
      %v1679 = vpop.permute.xlu0 %1678
      %1680 = vrot.lane.b32.xlu0 %v1617, 32
      %v1681 = vpop.permute.xlu0 %1680
      %1682 = vrot.lane.b32.xlu0 %v1618, 32
      %v1683 = vpop.permute.xlu0 %1682
      %1684 = vrot.lane.b32.xlu0 %v1619, 32
      %v1685 = vpop.permute.xlu0 %1684
      %1686 = vrot.lane.b32.xlu0 %v1620, 32
      %v1687 = vpop.permute.xlu0 %1686
      %1688 = vrot.lane.b32.xlu0 %v1621, 32
      %v1689 = vpop.permute.xlu0 %1688
      %1690 = vrot.lane.b32.xlu0 %v1622, 32
      %v1691 = vpop.permute.xlu0 %1690
      %1692 = vrot.lane.b32.xlu0 %v1623, 32
      %v1693 = vpop.permute.xlu0 %1692
      %1694 = vrot.lane.b32.xlu0 %v1624, 32
      %v1695 = vpop.permute.xlu0 %1694
      %1696 = vrot.lane.b32.xlu0 %v1625, 32
      %v1697 = vpop.permute.xlu0 %1696
      %1698 = vrot.lane.b32.xlu0 %v1626, 32
      %v1699 = vpop.permute.xlu0 %1698
      %1700 = vrot.lane.b32.xlu0 %v1627, 32
      %v1701 = vpop.permute.xlu0 %1700
      %1702 = vrot.lane.b32.xlu0 %v1628, 32
      %v1703 = vpop.permute.xlu0 %1702
      %1704 = vrot.lane.b32.xlu0 %v1629, 32
      %v1705 = vpop.permute.xlu0 %1704
      %1706 = vrot.lane.b32.xlu0 %v1630, 32
      %v1707 = vpop.permute.xlu0 %1706
      %1708 = vrot.lane.b32.xlu0 %v1631, 32
      %v1709 = vpop.permute.xlu0 %1708
      %1710 = vrot.lane.b32.xlu0 %v1632, 32
      %v1711 = vpop.permute.xlu0 %1710
      %1712 = vrot.lane.b32.xlu0 %v1633, 32
      %v1713 = vpop.permute.xlu0 %1712
      %1714 = vrot.lane.b32.xlu0 %v1634, 32
      %v1715 = vpop.permute.xlu0 %1714
      %1716 = vrot.lane.b32.xlu0 %v1635, 32
      %v1717 = vpop.permute.xlu0 %1716
      %1718 = vrot.lane.b32.xlu0 %v1636, 32
      %v1719 = vpop.permute.xlu0 %1718
      %1720 = vrot.lane.b32.xlu0 %v1637, 32
      %v1721 = vpop.permute.xlu0 %1720
      %1722 = vrot.lane.b32.xlu0 %v1638, 32
      %v1723 = vpop.permute.xlu0 %1722
      %1724 = vrot.lane.b32.xlu0 %v1639, 32
      %v1725 = vpop.permute.xlu0 %1724
      %1726 = vrot.lane.b32.xlu0 %v1640, 32
      %v1727 = vpop.permute.xlu0 %1726
      %1728 = vrot.lane.b32.xlu0 %v1641, 32
      %v1729 = vpop.permute.xlu0 %1728
      %1730 = vrot.lane.b32.xlu0 %v1642, 32
      %v1731 = vpop.permute.xlu0 %1730
      %1732 = vrot.lane.b32.xlu0 %v1643, 32
      %v1733 = vpop.permute.xlu0 %1732
      %vm1764 = vcmask 294144
      %1765 = vst.msk [vmem:[#allocation2] sm:$0xff] %vm1764, %v1675
      %vm1766 = vcmask 293120
      %1767 = vst.msk [vmem:[#allocation2 + $0x8] sm:$0x7f] %vm1766, %v1677
      %1768 = vst.msk [vmem:[#allocation2 + $0x10] sm:$0xff] %vm1764, %v1679
      %1769 = vst.msk [vmem:[#allocation2 + $0x18] sm:$0x7f] %vm1766, %v1681
      %1770 = vst.msk [vmem:[#allocation2 + $0x20] sm:$0xff] %vm1764, %v1683
      %1771 = vst.msk [vmem:[#allocation2 + $0x28] sm:$0x7f] %vm1766, %v1685
      %1772 = vst.msk [vmem:[#allocation2 + $0x30] sm:$0xff] %vm1764, %v1687
      %1773 = vst.msk [vmem:[#allocation2 + $0x38] sm:$0x7f] %vm1766, %v1689
      %1774 = vst.msk [vmem:[#allocation2 + $0x40] sm:$0xff] %vm1764, %v1691
      %1775 = vst.msk [vmem:[#allocation2 + $0x48] sm:$0x7f] %vm1766, %v1693
      %1776 = vst.msk [vmem:[#allocation2 + $0x50] sm:$0xff] %vm1764, %v1695
      %1777 = vst.msk [vmem:[#allocation2 + $0x58] sm:$0x7f] %vm1766, %v1697
      %1778 = vst.msk [vmem:[#allocation2 + $0x60] sm:$0xff] %vm1764, %v1699
      %1779 = vst.msk [vmem:[#allocation2 + $0x68] sm:$0x7f] %vm1766, %v1701
      %1780 = vst.msk [vmem:[#allocation2 + $0x70] sm:$0xff] %vm1764, %v1703
      %1781 = vst.msk [vmem:[#allocation2 + $0x78] sm:$0x7f] %vm1766, %v1705
      %1782 = vst.msk [vmem:[#allocation2 + $0x80] sm:$0xff] %vm1764, %v1707
      %1783 = vst.msk [vmem:[#allocation2 + $0x88] sm:$0x7f] %vm1766, %v1709
      %1784 = vst.msk [vmem:[#allocation2 + $0x90] sm:$0xff] %vm1764, %v1711
      %1785 = vst.msk [vmem:[#allocation2 + $0x98] sm:$0x7f] %vm1766, %v1713
      %1786 = vst.msk [vmem:[#allocation2 + $0xa0] sm:$0xff] %vm1764, %v1715
      %1787 = vst.msk [vmem:[#allocation2 + $0xa8] sm:$0x7f] %vm1766, %v1717
      %1788 = vst.msk [vmem:[#allocation2 + $0xb0] sm:$0xff] %vm1764, %v1719
      %1789 = vst.msk [vmem:[#allocation2 + $0xb8] sm:$0x7f] %vm1766, %v1721
      %1790 = vst.msk [vmem:[#allocation2 + $0xc0] sm:$0xff] %vm1764, %v1723
      %1791 = vst.msk [vmem:[#allocation2 + $0xc8] sm:$0x7f] %vm1766, %v1725
      %1792 = vst.msk [vmem:[#allocation2 + $0xd0] sm:$0xff] %vm1764, %v1727
      %1793 = vst.msk [vmem:[#allocation2 + $0xd8] sm:$0x7f] %vm1766, %v1729
      %1794 = vst.msk [vmem:[#allocation2 + $0xe0] sm:$0xff] %vm1764, %v1731
      %1795 = vst.msk [vmem:[#allocation2 + $0xe8] sm:$0x7f] %vm1766, %v1733
      %v1796 = vld [vmem:[#allocation2] sm:$0xff]
      %v1797 = vld [vmem:[#allocation2 + $0x8] sm:$0xff]
      %v1798 = vld [vmem:[#allocation2 + $0x10] sm:$0xff]
      %v1799 = vld [vmem:[#allocation2 + $0x18] sm:$0xff]
      %v1800 = vld [vmem:[#allocation2 + $0x20] sm:$0xff]
      %v1801 = vld [vmem:[#allocation2 + $0x28] sm:$0xff]
      %v1802 = vld [vmem:[#allocation2 + $0x30] sm:$0xff]
      %v1803 = vld [vmem:[#allocation2 + $0x38] sm:$0xff]
      %v1804 = vld [vmem:[#allocation2 + $0x40] sm:$0xff]
      %v1805 = vld [vmem:[#allocation2 + $0x48] sm:$0xff]
      %v1806 = vld [vmem:[#allocation2 + $0x50] sm:$0xff]
      %v1807 = vld [vmem:[#allocation2 + $0x58] sm:$0xff]
      %v1808 = vld [vmem:[#allocation2 + $0x60] sm:$0xff]
      %v1809 = vld [vmem:[#allocation2 + $0x68] sm:$0xff]
      %v1810 = vld [vmem:[#allocation2 + $0x70] sm:$0xff]
      %v1811 = vld [vmem:[#allocation2 + $0x78] sm:$0xff]
      %v1812 = vld [vmem:[#allocation2 + $0x80] sm:$0xff]
      %v1813 = vld [vmem:[#allocation2 + $0x88] sm:$0xff]
      %v1814 = vld [vmem:[#allocation2 + $0x90] sm:$0xff]
      %v1815 = vld [vmem:[#allocation2 + $0x98] sm:$0xff]
      %v1816 = vld [vmem:[#allocation2 + $0xa0] sm:$0xff]
      %v1817 = vld [vmem:[#allocation2 + $0xa8] sm:$0xff]
      %v1818 = vld [vmem:[#allocation2 + $0xb0] sm:$0xff]
      %v1819 = vld [vmem:[#allocation2 + $0xb8] sm:$0xff]
      %v1820 = vld [vmem:[#allocation2 + $0xc0] sm:$0xff]
      %v1821 = vld [vmem:[#allocation2 + $0xc8] sm:$0xff]
      %v1822 = vld [vmem:[#allocation2 + $0xd0] sm:$0xff]
      %v1823 = vld [vmem:[#allocation2 + $0xd8] sm:$0xff]
      %v1824 = vld [vmem:[#allocation2 + $0xe0] sm:$0xff]
      %v1825 = vld [vmem:[#allocation2 + $0xe8] sm:$0xff]
      %v1826 = vld [vmem:[#allocation2 + $0xf0] sm:$0xff]
      %v1827 = vld [vmem:[#allocation2 + $0xf8] sm:$0xff]
      %v1828 = vpack.c.bf16 %v1797, %v1796
      %v1829 = vpack.c.bf16 %v1799, %v1798
      %v1830 = vpack.c.bf16 %v1801, %v1800
      %v1831 = vpack.c.bf16 %v1803, %v1802
      %v1832 = vpack.c.bf16 %v1805, %v1804
      %v1833 = vpack.c.bf16 %v1807, %v1806
      %v1834 = vpack.c.bf16 %v1809, %v1808
      %v1835 = vpack.c.bf16 %v1811, %v1810
      %v1836 = vpack.c.bf16 %v1813, %v1812
      %v1837 = vpack.c.bf16 %v1815, %v1814
      %v1838 = vpack.c.bf16 %v1817, %v1816
      %v1839 = vpack.c.bf16 %v1819, %v1818
      %v1840 = vpack.c.bf16 %v1821, %v1820
      %v1841 = vpack.c.bf16 %v1823, %v1822
      %v1842 = vpack.c.bf16 %v1825, %v1824
      %v1843 = vpack.c.bf16 %v1827, %v1826
      %v1844 = vld [vmem:[%s1] sm:$0xf]
      %v1845 = vld [vmem:[%s1 + $0x4] sm:$0xf]
      %v1846 = vld [vmem:[%s1 + $0x8] sm:$0xf]
      %v1847 = vld [vmem:[%s1 + $0xc] sm:$0xf]
      %v1848 = vld [vmem:[%s1 + $0x10] sm:$0x3]
      %v1849 = vld [vmem:[%s2] sm:$0x1]
      %v1851 = vlaneseq
      %v1852 = vshrl.u32 %v1851, 7
      %v1853 = vsub.s32 0, %v1852
      %v1854 = vrot.slane %v1849, %v1853
      %v1861 = vunpack.c.l.b16 %v1844
      %v1862 = vunpack.c.l.b16 %v1845
      %v1863 = vunpack.c.l.b16 %v1846
      %v1864 = vunpack.c.l.b16 %v1847
      %v1865 = vunpack.c.l.b16 %v1848
      %v1866 = vpack.c.b16 %v1862, %v1861
      %v1867 = vpack.c.b16 %v1864, %v1863
      %v1868 = vpack.c.b16 %v1865, %v1865
      %v1872 = vsel %vm210, %v1828, 0
      %v1875 = vsel %vm210, %v1829, 0
      %v1878 = vsel %vm210, %v1830, 0
      %v1881 = vsel %vm210, %v1831, 0
      %v1884 = vsel %vm210, %v1832, 0
      %v1887 = vsel %vm210, %v1833, 0
      %v1890 = vsel %vm210, %v1834, 0
      %v1893 = vsel %vm210, %v1835, 0
      %v1896 = vsel %vm210, %v1836, 0
      %v1899 = vsel %vm210, %v1837, 0
      %v1902 = vsel %vm210, %v1838, 0
      %v1905 = vsel %vm210, %v1839, 0
      %v1908 = vsel %vm210, %v1840, 0
      %v1911 = vsel %vm210, %v1841, 0
      %v1914 = vsel %vm210, %v1842, 0
      %v1917 = vsel %vm210, %v1843, 0
      %vm1919 = vcmask 1041408
      %v1921 = vsel %vm1919, %v1868, 0
      %1923 = vmatprep.subr.bf16.mxu0 0
      %1924 = vmatpush1.bf16.msra.mxu0 %v1866
      %1925 = vmatprep.subr.bf16.mxu0 0
      %1926 = vmatpush1.bf16.msra.mxu0 %v1867
      %1927 = vmatprep.subr.bf16.mxu0 0
      %1928 = vmatpush1.bf16.msra.mxu0 %v1921
      %1929 = vmatprep.subr.bf16.mxu0 0
      %1930 = vmatpush1.bf16.msra.mxu0 0
      %1931 = vmatprep.subr.bf16.mxu0 0
      %1932 = vmatpush1.bf16.msra.mxu0 0
      %1933 = vmatprep.subr.bf16.mxu0 0
      %1934 = vmatpush1.bf16.msra.mxu0 0
      %1935 = vmatprep.subr.bf16.mxu0 0
      %1936 = vmatpush1.bf16.msra.mxu0 0
      %1937 = vmatprep.subr.bf16.mxu0 0
      %1938 = vmatpush1.bf16.msra.mxu0 0
      %1939 = vmatprep.subr.bf16.mxu0 0
      %1940 = vmatpush1.bf16.msra.mxu0 0
      %1941 = vmatprep.subr.bf16.mxu0 0
      %1942 = vmatpush1.bf16.msra.mxu0 0
      %1943 = vmatprep.subr.bf16.mxu0 0
      %1944 = vmatpush1.bf16.msra.mxu0 0
      %1945 = vmatprep.subr.bf16.mxu0 0
      %1946 = vmatpush1.bf16.msra.mxu0 0
      %1947 = vmatprep.subr.bf16.mxu0 0
      %1948 = vmatpush1.bf16.msra.mxu0 0
      %1949 = vmatprep.subr.bf16.mxu0 0
      %1950 = vmatpush1.bf16.msra.mxu0 0
      %1951 = vmatprep.subr.bf16.mxu0 0
      %1952 = vmatpush1.bf16.msra.mxu0 0
      %1953 = vmatprep.subr.bf16.mxu0 0
      %1954 = vmatpush1.bf16.msra.mxu0 0
      %1955 = vmatprep.mubr.bf16.mxu0 0
      %1956 = vmatmul.mubr.bf16.gmra.mrb[0].mxu0 %v1872
      %v1957 = vpop.f32.mrb[0].mxu0
      %v1958 = vadd.f32 %v1854, %v1957
      %v1959 = vpop.f32.mrb[0].mxu0
      %v1960 = vpop.f32.mrb[0].mxu0
      %v1961 = vadd.f32 %v1854, %v1960
      %v1962 = vpop.f32.mrb[0].mxu0
      %1963 = vmatprep.mubr.bf16.mxu0 0
      %1964 = vmatmul.mubr.bf16.gmra.mrb[0].mxu0 %v1875
      %v1965 = vpop.f32.mrb[0].mxu0
      %v1966 = vadd.f32 %v1854, %v1965
      %v1967 = vpop.f32.mrb[0].mxu0
      %v1968 = vpop.f32.mrb[0].mxu0
      %v1969 = vadd.f32 %v1854, %v1968
      %v1970 = vpop.f32.mrb[0].mxu0
      %1971 = vmatprep.mubr.bf16.mxu0 0
      %1972 = vmatmul.mubr.bf16.gmra.mrb[0].mxu0 %v1878
      %v1973 = vpop.f32.mrb[0].mxu0
      %v1974 = vadd.f32 %v1854, %v1973
      %v1975 = vpop.f32.mrb[0].mxu0
      %v1976 = vpop.f32.mrb[0].mxu0
      %v1977 = vadd.f32 %v1854, %v1976
      %v1978 = vpop.f32.mrb[0].mxu0
      %1979 = vmatprep.mubr.bf16.mxu0 0
      %1980 = vmatmul.mubr.bf16.gmra.mrb[0].mxu0 %v1881
      %v1981 = vpop.f32.mrb[0].mxu0
      %v1982 = vadd.f32 %v1854, %v1981
      %v1983 = vpop.f32.mrb[0].mxu0
      %v1984 = vpop.f32.mrb[0].mxu0
      %v1985 = vadd.f32 %v1854, %v1984
      %v1986 = vpop.f32.mrb[0].mxu0
      %1987 = vmatprep.mubr.bf16.mxu0 0
      %1988 = vmatmul.mubr.bf16.gmra.mrb[0].mxu0 %v1884
      %v1989 = vpop.f32.mrb[0].mxu0
      %v1990 = vadd.f32 %v1854, %v1989
      %v1991 = vpop.f32.mrb[0].mxu0
      %v1992 = vpop.f32.mrb[0].mxu0
      %v1993 = vadd.f32 %v1854, %v1992
      %v1994 = vpop.f32.mrb[0].mxu0
      %1995 = vmatprep.mubr.bf16.mxu0 0
      %1996 = vmatmul.mubr.bf16.gmra.mrb[0].mxu0 %v1887
      %v1997 = vpop.f32.mrb[0].mxu0
      %v1998 = vadd.f32 %v1854, %v1997
      %v1999 = vpop.f32.mrb[0].mxu0
      %v2000 = vpop.f32.mrb[0].mxu0
      %v2001 = vadd.f32 %v1854, %v2000
      %v2002 = vpop.f32.mrb[0].mxu0
      %2003 = vmatprep.mubr.bf16.mxu0 0
      %2004 = vmatmul.mubr.bf16.gmra.mrb[0].mxu0 %v1890
      %v2005 = vpop.f32.mrb[0].mxu0
      %v2006 = vadd.f32 %v1854, %v2005
      %v2007 = vpop.f32.mrb[0].mxu0
      %v2008 = vpop.f32.mrb[0].mxu0
      %v2009 = vadd.f32 %v1854, %v2008
      %v2010 = vpop.f32.mrb[0].mxu0
      %2011 = vmatprep.mubr.bf16.mxu0 0
      %2012 = vmatmul.mubr.bf16.gmra.mrb[0].mxu0 %v1893
      %v2013 = vpop.f32.mrb[0].mxu0
      %v2014 = vadd.f32 %v1854, %v2013
      %v2015 = vpop.f32.mrb[0].mxu0
      %v2016 = vpop.f32.mrb[0].mxu0
      %v2017 = vadd.f32 %v1854, %v2016
      %v2018 = vpop.f32.mrb[0].mxu0
      %2019 = vmatprep.mubr.bf16.mxu0 0
      %2020 = vmatmul.mubr.bf16.gmra.mrb[0].mxu0 %v1896
      %v2021 = vpop.f32.mrb[0].mxu0
      %v2022 = vadd.f32 %v1854, %v2021
      %v2023 = vpop.f32.mrb[0].mxu0
      %v2024 = vpop.f32.mrb[0].mxu0
      %v2025 = vadd.f32 %v1854, %v2024
      %v2026 = vpop.f32.mrb[0].mxu0
      %2027 = vmatprep.mubr.bf16.mxu0 0
      %2028 = vmatmul.mubr.bf16.gmra.mrb[0].mxu0 %v1899
      %v2029 = vpop.f32.mrb[0].mxu0
      %v2030 = vadd.f32 %v1854, %v2029
      %v2031 = vpop.f32.mrb[0].mxu0
      %v2032 = vpop.f32.mrb[0].mxu0
      %v2033 = vadd.f32 %v1854, %v2032
      %v2034 = vpop.f32.mrb[0].mxu0
      %2035 = vmatprep.mubr.bf16.mxu0 0
      %2036 = vmatmul.mubr.bf16.gmra.mrb[0].mxu0 %v1902
      %v2037 = vpop.f32.mrb[0].mxu0
      %v2038 = vadd.f32 %v1854, %v2037
      %v2039 = vpop.f32.mrb[0].mxu0
      %v2040 = vpop.f32.mrb[0].mxu0
      %v2041 = vadd.f32 %v1854, %v2040
      %v2042 = vpop.f32.mrb[0].mxu0
      %2043 = vmatprep.mubr.bf16.mxu0 0
      %2044 = vmatmul.mubr.bf16.gmra.mrb[0].mxu0 %v1905
      %v2045 = vpop.f32.mrb[0].mxu0
      %v2046 = vadd.f32 %v1854, %v2045
      %v2047 = vpop.f32.mrb[0].mxu0
      %v2048 = vpop.f32.mrb[0].mxu0
      %v2049 = vadd.f32 %v1854, %v2048
      %v2050 = vpop.f32.mrb[0].mxu0
      %2051 = vmatprep.mubr.bf16.mxu0 0
      %2052 = vmatmul.mubr.bf16.gmra.mrb[0].mxu0 %v1908
      %v2053 = vpop.f32.mrb[0].mxu0
      %v2054 = vadd.f32 %v1854, %v2053
      %v2055 = vpop.f32.mrb[0].mxu0
      %v2056 = vpop.f32.mrb[0].mxu0
      %v2057 = vadd.f32 %v1854, %v2056
      %v2058 = vpop.f32.mrb[0].mxu0
      %2059 = vmatprep.mubr.bf16.mxu0 0
      %2060 = vmatmul.mubr.bf16.gmra.mrb[0].mxu0 %v1911
      %v2061 = vpop.f32.mrb[0].mxu0
      %v2062 = vadd.f32 %v1854, %v2061
      %v2063 = vpop.f32.mrb[0].mxu0
      %v2064 = vpop.f32.mrb[0].mxu0
      %v2065 = vadd.f32 %v1854, %v2064
      %v2066 = vpop.f32.mrb[0].mxu0
      %2067 = vmatprep.mubr.bf16.mxu0 0
      %2068 = vmatmul.mubr.bf16.gmra.mrb[0].mxu0 %v1914
      %v2069 = vpop.f32.mrb[0].mxu0
      %v2070 = vadd.f32 %v1854, %v2069
      %v2071 = vpop.f32.mrb[0].mxu0
      %v2072 = vpop.f32.mrb[0].mxu0
      %v2073 = vadd.f32 %v1854, %v2072
      %v2074 = vpop.f32.mrb[0].mxu0
      %2075 = vmatprep.mubr.bf16.mxu0 0
      %2076 = vmatmul.mubr.bf16.gmra.mrb[0].mxu0 %v1917
      %v2077 = vpop.f32.mrb[0].mxu0
      %v2078 = vadd.f32 %v1854, %v2077
      %v2079 = vpop.f32.mrb[0].mxu0
      %v2080 = vpop.f32.mrb[0].mxu0
      %v2081 = vadd.f32 %v1854, %v2080
      %v2082 = vpop.f32.mrb[0].mxu0
      %2083 = vdwg.mxu0
      %vm2084 = vcmask 64512
      %2085 = vst.msk [vmem:[%s204] sm:$0xff] %vm2084, %v1958
      %2086 = vst.msk [vmem:[%s204 + $0x8] sm:$0xff] %vm2084, %v1961
      %2087 = vst.msk [vmem:[%s204 + $0x10] sm:$0xff] %vm2084, %v1966
      %2088 = vst.msk [vmem:[%s204 + $0x18] sm:$0xff] %vm2084, %v1969
      %2089 = vst.msk [vmem:[%s204 + $0x20] sm:$0xff] %vm2084, %v1974
      %2090 = vst.msk [vmem:[%s204 + $0x28] sm:$0xff] %vm2084, %v1977
      %2091 = vst.msk [vmem:[%s204 + $0x30] sm:$0xff] %vm2084, %v1982
      %2092 = vst.msk [vmem:[%s204 + $0x38] sm:$0xff] %vm2084, %v1985
      %2093 = vst.msk [vmem:[%s204 + $0x40] sm:$0xff] %vm2084, %v1990
      %2094 = vst.msk [vmem:[%s204 + $0x48] sm:$0xff] %vm2084, %v1993
      %2095 = vst.msk [vmem:[%s204 + $0x50] sm:$0xff] %vm2084, %v1998
      %2096 = vst.msk [vmem:[%s204 + $0x58] sm:$0xff] %vm2084, %v2001
      %2097 = vst.msk [vmem:[%s204 + $0x60] sm:$0xff] %vm2084, %v2006
      %2098 = vst.msk [vmem:[%s204 + $0x68] sm:$0xff] %vm2084, %v2009
      %2099 = vst.msk [vmem:[%s204 + $0x70] sm:$0xff] %vm2084, %v2014
      %2100 = vst.msk [vmem:[%s204 + $0x78] sm:$0xff] %vm2084, %v2017
      %2101 = vst.msk [vmem:[%s204 + $0x80] sm:$0xff] %vm2084, %v2022
      %2102 = vst.msk [vmem:[%s204 + $0x88] sm:$0xff] %vm2084, %v2025
      %2103 = vst.msk [vmem:[%s204 + $0x90] sm:$0xff] %vm2084, %v2030
      %2104 = vst.msk [vmem:[%s204 + $0x98] sm:$0xff] %vm2084, %v2033
      %2105 = vst.msk [vmem:[%s204 + $0xa0] sm:$0xff] %vm2084, %v2038
      %2106 = vst.msk [vmem:[%s204 + $0xa8] sm:$0xff] %vm2084, %v2041
      %2107 = vst.msk [vmem:[%s204 + $0xb0] sm:$0xff] %vm2084, %v2046
      %2108 = vst.msk [vmem:[%s204 + $0xb8] sm:$0xff] %vm2084, %v2049
      %2109 = vst.msk [vmem:[%s204 + $0xc0] sm:$0xff] %vm2084, %v2054
      %2110 = vst.msk [vmem:[%s204 + $0xc8] sm:$0xff] %vm2084, %v2057
      %2111 = vst.msk [vmem:[%s204 + $0xd0] sm:$0xff] %vm2084, %v2062
      %2112 = vst.msk [vmem:[%s204 + $0xd8] sm:$0xff] %vm2084, %v2065
      %2113 = vst.msk [vmem:[%s204 + $0xe0] sm:$0xff] %vm2084, %v2070
      %2114 = vst.msk [vmem:[%s204 + $0xe8] sm:$0xff] %vm2084, %v2073
      %2115 = vst.msk [vmem:[%s204 + $0xf0] sm:$0xff] %vm2084, %v2078
      %2116 = vst.msk [vmem:[%s204 + $0xf8] sm:$0xff] %vm2084, %v2081
      %v2117 = vsel %vm2084, %v1958, 0.0
      %v2118 = vsel %vm2084, %v1966, 0.0
      %v2119 = vadd.f32 %v2117, %v2118
      %v2120 = vsel %vm2084, %v1974, 0.0
      %v2121 = vadd.f32 %v2119, %v2120
      %v2122 = vsel %vm2084, %v1982, 0.0
      %v2123 = vadd.f32 %v2121, %v2122
      %v2124 = vsel %vm2084, %v1990, 0.0
      %v2125 = vadd.f32 %v2123, %v2124
      %v2126 = vsel %vm2084, %v1998, 0.0
      %v2127 = vadd.f32 %v2125, %v2126
      %v2128 = vsel %vm2084, %v2006, 0.0
      %v2129 = vadd.f32 %v2127, %v2128
      %v2130 = vsel %vm2084, %v2014, 0.0
      %v2131 = vadd.f32 %v2129, %v2130
      %v2132 = vsel %vm2084, %v2022, 0.0
      %v2133 = vadd.f32 %v2131, %v2132
      %v2134 = vsel %vm2084, %v2030, 0.0
      %v2135 = vadd.f32 %v2133, %v2134
      %v2136 = vsel %vm2084, %v2038, 0.0
      %v2137 = vadd.f32 %v2135, %v2136
      %v2138 = vsel %vm2084, %v2046, 0.0
      %v2139 = vadd.f32 %v2137, %v2138
      %v2140 = vsel %vm2084, %v2054, 0.0
      %v2141 = vadd.f32 %v2139, %v2140
      %v2142 = vsel %vm2084, %v2062, 0.0
      %v2143 = vadd.f32 %v2141, %v2142
      %v2144 = vsel %vm2084, %v2070, 0.0
      %v2145 = vadd.f32 %v2143, %v2144
      %v2146 = vsel %vm2084, %v2078, 0.0
      %v2147 = vadd.f32 %v2145, %v2146
      %v2148 = vsel %vm2084, %v1961, 0.0
      %v2149 = vsel %vm2084, %v1969, 0.0
      %v2150 = vadd.f32 %v2148, %v2149
      %v2151 = vsel %vm2084, %v1977, 0.0
      %v2152 = vadd.f32 %v2150, %v2151
      %v2153 = vsel %vm2084, %v1985, 0.0
      %v2154 = vadd.f32 %v2152, %v2153
      %v2155 = vsel %vm2084, %v1993, 0.0
      %v2156 = vadd.f32 %v2154, %v2155
      %v2157 = vsel %vm2084, %v2001, 0.0
      %v2158 = vadd.f32 %v2156, %v2157
      %v2159 = vsel %vm2084, %v2009, 0.0
      %v2160 = vadd.f32 %v2158, %v2159
      %v2161 = vsel %vm2084, %v2017, 0.0
      %v2162 = vadd.f32 %v2160, %v2161
      %v2163 = vsel %vm2084, %v2025, 0.0
      %v2164 = vadd.f32 %v2162, %v2163
      %v2165 = vsel %vm2084, %v2033, 0.0
      %v2166 = vadd.f32 %v2164, %v2165
      %v2167 = vsel %vm2084, %v2041, 0.0
      %v2168 = vadd.f32 %v2166, %v2167
      %v2169 = vsel %vm2084, %v2049, 0.0
      %v2170 = vadd.f32 %v2168, %v2169
      %v2171 = vsel %vm2084, %v2057, 0.0
      %v2172 = vadd.f32 %v2170, %v2171
      %v2173 = vsel %vm2084, %v2065, 0.0
      %v2174 = vadd.f32 %v2172, %v2173
      %v2175 = vsel %vm2084, %v2073, 0.0
      %v2176 = vadd.f32 %v2174, %v2175
      %v2177 = vsel %vm2084, %v2081, 0.0
      %v2178 = vadd.f32 %v2176, %v2177
      %v2179 = vsel %vm2084, %v2147, 0.0
      %v2180 = vsel %vm2084, %v2178, 0.0
      %v2181 = vadd.f32 %v2179, %v2180
      %v2182 = vrot.slane %v2181, 4
      %v2183 = vadd.f32 %v2181, %v2182
      %v2184 = vrot.slane %v2183, 2
      %v2185 = vadd.f32 %v2183, %v2184
      %v2186 = vrot.slane %v2185, 1
      %v2187 = vadd.f32 %v2185, %v2186
      %vm2188 = vcmask 57344
      %2189 = vst.msk [vmem:[%s208] sm:$0x1] %vm2188, %v2187
      %v2190 = vmul.f32 %v1958, %v1958
      %v2191 = vmul.f32 %v1961, %v1961
      %v2192 = vmul.f32 %v1966, %v1966
      %v2193 = vmul.f32 %v1969, %v1969
      %v2194 = vmul.f32 %v1974, %v1974
      %v2195 = vmul.f32 %v1977, %v1977
      %v2196 = vmul.f32 %v1982, %v1982
      %v2197 = vmul.f32 %v1985, %v1985
      %v2198 = vmul.f32 %v1990, %v1990
      %v2199 = vmul.f32 %v1993, %v1993
      %v2200 = vmul.f32 %v1998, %v1998
      %v2201 = vmul.f32 %v2001, %v2001
      %v2202 = vmul.f32 %v2006, %v2006
      %v2203 = vmul.f32 %v2009, %v2009
      %v2204 = vmul.f32 %v2014, %v2014
      %v2205 = vmul.f32 %v2017, %v2017
      %v2206 = vmul.f32 %v2022, %v2022
      %v2207 = vmul.f32 %v2025, %v2025
      %v2208 = vmul.f32 %v2030, %v2030
      %v2209 = vmul.f32 %v2033, %v2033
      %v2210 = vmul.f32 %v2038, %v2038
      %v2211 = vmul.f32 %v2041, %v2041
      %v2212 = vmul.f32 %v2046, %v2046
      %v2213 = vmul.f32 %v2049, %v2049
      %v2214 = vmul.f32 %v2054, %v2054
      %v2215 = vmul.f32 %v2057, %v2057
      %v2216 = vmul.f32 %v2062, %v2062
      %v2217 = vmul.f32 %v2065, %v2065
      %v2218 = vmul.f32 %v2070, %v2070
      %v2219 = vmul.f32 %v2073, %v2073
      %v2220 = vmul.f32 %v2078, %v2078
      %v2221 = vmul.f32 %v2081, %v2081
      %v2222 = vsel %vm2084, %v2190, 0.0
      %v2223 = vsel %vm2084, %v2192, 0.0
      %v2224 = vadd.f32 %v2222, %v2223
      %v2225 = vsel %vm2084, %v2194, 0.0
      %v2226 = vadd.f32 %v2224, %v2225
      %v2227 = vsel %vm2084, %v2196, 0.0
      %v2228 = vadd.f32 %v2226, %v2227
      %v2229 = vsel %vm2084, %v2198, 0.0
      %v2230 = vadd.f32 %v2228, %v2229
      %v2231 = vsel %vm2084, %v2200, 0.0
      %v2232 = vadd.f32 %v2230, %v2231
      %v2233 = vsel %vm2084, %v2202, 0.0
      %v2234 = vadd.f32 %v2232, %v2233
      %v2235 = vsel %vm2084, %v2204, 0.0
      %v2236 = vadd.f32 %v2234, %v2235
      %v2237 = vsel %vm2084, %v2206, 0.0
      %v2238 = vadd.f32 %v2236, %v2237
      %v2239 = vsel %vm2084, %v2208, 0.0
      %v2240 = vadd.f32 %v2238, %v2239
      %v2241 = vsel %vm2084, %v2210, 0.0
      %v2242 = vadd.f32 %v2240, %v2241
      %v2243 = vsel %vm2084, %v2212, 0.0
      %v2244 = vadd.f32 %v2242, %v2243
      %v2245 = vsel %vm2084, %v2214, 0.0
      %v2246 = vadd.f32 %v2244, %v2245
      %v2247 = vsel %vm2084, %v2216, 0.0
      %v2248 = vadd.f32 %v2246, %v2247
      %v2249 = vsel %vm2084, %v2218, 0.0
      %v2250 = vadd.f32 %v2248, %v2249
      %v2251 = vsel %vm2084, %v2220, 0.0
      %v2252 = vadd.f32 %v2250, %v2251
      %v2253 = vsel %vm2084, %v2191, 0.0
      %v2254 = vsel %vm2084, %v2193, 0.0
      %v2255 = vadd.f32 %v2253, %v2254
      %v2256 = vsel %vm2084, %v2195, 0.0
      %v2257 = vadd.f32 %v2255, %v2256
      %v2258 = vsel %vm2084, %v2197, 0.0
      %v2259 = vadd.f32 %v2257, %v2258
      %v2260 = vsel %vm2084, %v2199, 0.0
      %v2261 = vadd.f32 %v2259, %v2260
      %v2262 = vsel %vm2084, %v2201, 0.0
      %v2263 = vadd.f32 %v2261, %v2262
      %v2264 = vsel %vm2084, %v2203, 0.0
      %v2265 = vadd.f32 %v2263, %v2264
      %v2266 = vsel %vm2084, %v2205, 0.0
      %v2267 = vadd.f32 %v2265, %v2266
      %v2268 = vsel %vm2084, %v2207, 0.0
      %v2269 = vadd.f32 %v2267, %v2268
      %v2270 = vsel %vm2084, %v2209, 0.0
      %v2271 = vadd.f32 %v2269, %v2270
      %v2272 = vsel %vm2084, %v2211, 0.0
      %v2273 = vadd.f32 %v2271, %v2272
      %v2274 = vsel %vm2084, %v2213, 0.0
      %v2275 = vadd.f32 %v2273, %v2274
      %v2276 = vsel %vm2084, %v2215, 0.0
      %v2277 = vadd.f32 %v2275, %v2276
      %v2278 = vsel %vm2084, %v2217, 0.0
      %v2279 = vadd.f32 %v2277, %v2278
      %v2280 = vsel %vm2084, %v2219, 0.0
      %v2281 = vadd.f32 %v2279, %v2280
      %v2282 = vsel %vm2084, %v2221, 0.0
      %v2283 = vadd.f32 %v2281, %v2282
      %v2284 = vsel %vm2084, %v2252, 0.0
      %v2285 = vsel %vm2084, %v2283, 0.0
      %v2286 = vadd.f32 %v2284, %v2285
      %v2287 = vrot.slane %v2286, 4
      %v2288 = vadd.f32 %v2286, %v2287
      %v2289 = vrot.slane %v2288, 2
      %v2290 = vadd.f32 %v2288, %v2289
      %v2291 = vrot.slane %v2290, 1
      %v2292 = vadd.f32 %v2290, %v2291
      %2293 = vst.msk [vmem:[%s208 + $0x1] sm:$0x1] %vm2188, %v2292
      %p2294 = scmp.lt.s32.totalorder %s16, 1
      %s2295 = scalar_select %p2294, %s16, 1
      %s2296 = smul.addr %s2295, 32
      %s2297 = smul.addr %s2296, 8
      %s2298 = scalar_lea.vmem %s3, %s2297
      %p2299 = scmp.lt.s32.totalorder %s16, 1
      %s2300 = scalar_select %p2299, %s16, 1
      %s2301 = smul.addr %s2300, 2
      %s2302 = scalar_lea.vmem %s4, %s2301
      // Predicated region
      $region33: #{conv_synbn_relu_forward.2} parent=31 // pred_check
        %p2303 = pneg %p102
      $region34: #{conv_synbn_relu_forward.2} parent=31 // pred_check_branch
        %2305 = sbr.rel (%p2303) target = $region36
      $region35: #{conv_synbn_relu_forward.2} parent=31 // pred_region
        _
      $region36: #{conv_synbn_relu_forward.2} parent=31 // pred_fallthru
        _
      // Predicated region
      $region37: #{conv_synbn_relu_forward.2} parent=31 // pred_check
        %p2306 = pneg %p128
      $region38: #{conv_synbn_relu_forward.2} parent=31 // pred_check_branch
        %2308 = sbr.rel (%p2306) target = $region40
      $region39: #{conv_synbn_relu_forward.2} parent=31 // pred_region
        _
      $region40: #{conv_synbn_relu_forward.2} parent=31 // pred_fallthru
        _
    $region32: #{conv_synbn_relu_forward.2} parent=5 // pred_fallthru
      _
    %p2309 = scmp.le.s32.totalorder 2, %s11
    // Predicated region
    $region41: #{conv_synbn_relu_forward.2} parent=5 // pred_check
      %p2310 = pneg %p2309
    $region42: #{conv_synbn_relu_forward.2} parent=5 // pred_check_branch
      %2312 = sbr.rel (%p2310) target = $region44
    $region43: #{conv_synbn_relu_forward.2} parent=5 // pred_region
      %s2313 = ssub.s32 %s11, 2
      // Predicated region
      $region45: #{conv_synbn_relu_forward.2} parent=43 // pred_check
        %p2314 = pneg %p108
      $region46: #{conv_synbn_relu_forward.2} parent=43 // pred_check_branch
        %2316 = sbr.rel (%p2314) target = $region48
      $region47: #{conv_synbn_relu_forward.2} parent=43 // pred_region
        %p2317 = scmp.lt.s32.totalorder %s17, 1
        %s2318 = scalar_select %p2317, %s17, 1
        %s2319 = smul.addr %s2318, 32
        %s2320 = smul.addr %s2319, 8
        %s2321 = scalar_lea.vmem %s3, %s2320
      $region48: #{conv_synbn_relu_forward.2} parent=43 // pred_fallthru
        _
      // Predicated region
      $region49: #{conv_synbn_relu_forward.2} parent=43 // pred_check
        %p2322 = pneg %p134
      $region50: #{conv_synbn_relu_forward.2} parent=43 // pred_check_branch
        %2324 = sbr.rel (%p2322) target = $region52
      $region51: #{conv_synbn_relu_forward.2} parent=43 // pred_region
        %p2325 = scmp.lt.s32.totalorder %s17, 1
        %s2326 = scalar_select %p2325, %s17, 1
        %s2327 = smul.addr %s2326, 2
        %s2328 = scalar_lea.vmem %s4, %s2327
      $region52: #{conv_synbn_relu_forward.2} parent=43 // pred_fallthru
        _
    $region44: #{conv_synbn_relu_forward.2} parent=5 // pred_fallthru
      _
  $region6: #{conv_synbn_relu_forward.2} parent=0 // loop_footer
    %s15 = sadd.s32 1, %s11
  $region7: #{conv_synbn_relu_forward.2} parent=0 // loop_footer_branch
    %10 = sbr.rel target = $region3
  $region8: #{conv_synbn_relu_forward.2} parent=0 // loop_exit
    _

</llo_original>
